<compile_context>
chip_gen: v6e
topology: v6e:2x2x1
jax: 0.10.0
libtpu: 0.0.40
codegen_flags: <defaults>
</compile_context>

<pallas_src>
import jax
import jax.numpy as jnp
from jax.experimental import pallas as pl
from jax.experimental.pallas import tpu as pltpu


def _round_up(n, m):
    return ((n + m - 1) // m) * m


def _make_kernel(scale, d_real, d_pad, use_skip, has_mask, mxu_dtype, approx_gelu):
    inv_d = 1.0 / float(d_real)

    def kernel(*refs):
        it = iter(refs)
        x_ref = next(it)
        keep_ref = next(it) if has_mask else None
        if scale > 1:
            cw_ref = next(it)
            cb_ref = next(it)
        g_ref = next(it)
        bta_ref = next(it)
        w1_ref = next(it)
        b1_ref = next(it)
        w2_ref = next(it)
        b2_ref = next(it)
        o_ref = next(it)

        if scale > 1:
            # Depthwise strided conv == per-channel weighted sum over the window.
            # Each k*d_pad lane offset is 128-aligned (d_pad % 128 == 0).
            y = None
            for k in range(scale):
                xk = x_ref[:, k * d_pad:(k + 1) * d_pad].astype(jnp.float32)
                if has_mask:
                    xk = xk * keep_ref[:, k:k + 1].astype(jnp.float32)
                term = xk * cw_ref[k:k + 1, :]
                y = term if y is None else y + term
            y = y + cb_ref[...]                       # conv bias, added once
        else:
            y = x_ref[...].astype(jnp.float32)
            if has_mask:
                y = y * keep_ref[...].astype(jnp.float32)

        # One-pass LayerNorm stats; divide by the REAL D (pad columns are zero).
        s1 = jnp.sum(y, axis=-1, keepdims=True)
        s2 = jnp.sum(y * y, axis=-1, keepdims=True)
        mu = s1 * inv_d
        var = s2 * inv_d - mu * mu
        yn = (y - mu) * jax.lax.rsqrt(var + 1e-5)
        yn = yn * g_ref[...] + bta_ref[...]           # pad lanes -> 0 (gamma/beta pad = 0)

        # MLP: Linear(D,H) -> GELU -> Linear(H,D); bf16 MXU operands, f32 acc.
        h = jnp.dot(yn.astype(mxu_dtype), w1_ref[...],
                    preferred_element_type=jnp.float32) + b1_ref[...]
        h = jax.nn.gelu(h, approximate=approx_gelu)
        out = jnp.dot(h.astype(mxu_dtype), w2_ref[...],
                      preferred_element_type=jnp.float32) + b2_ref[...]

        # TODO(synk): nn.Dropout(0.1) is identity in eval mode; not applied here.
        if use_skip:
            out = out + y                             # residual (scale == 1 only)

        o_ref[...] = out.astype(o_ref.dtype)

    return kernel


def _vmem_capacity_bytes():
    try:
        return int(pltpu.get_tpu_info().vmem_capacity_bytes)
    except Exception:
        return 64 * 1024 * 1024        # conservative fallback: v7x per-TC VMEM


def _pad2(a, rows, cols):
    a = jnp.asarray(a)
    return jnp.pad(a, ((0, rows - a.shape[0]), (0, cols - a.shape[1])))


def time_scale_processor(x, params, scale, mask=None, *, tm=None,
                         mxu_dtype=jnp.bfloat16, approx_gelu=True):
    """x: [B, S, D]; mask: optional [B, S] bool (True == masked out)."""
    B, S, D = x.shape
    cw, cb, g, bta, w1, b1, w2, b2 = params
    H = w1.shape[1]
    has_mask = mask is not None

    Dp = _round_up(D, 128)
    Hp = _round_up(H, 128)

    keep = (~mask).astype(x.dtype) if has_mask else None      # 1.0 = keep

    if scale > 1:
        pad_s = (-S) % scale              # same right zero-pad as the PyTorch forward
        if pad_s:
            x = jnp.pad(x, ((0, 0), (0, pad_s), (0, 0)))
            if has_mask:
                keep = jnp.pad(keep, ((0, 0), (0, pad_s)))    # pad steps are zero anyway
        So = x.shape[1] // scale
        x_rows = x.reshape(B * So, scale, D)
        if Dp != D:
            x_rows = jnp.pad(x_rows, ((0, 0), (0, 0), (0, Dp - D)))
        x_rows = x_rows.reshape(B * So, scale * Dp)
        keep_rows = keep.reshape(B * So, scale) if has_mask else None
    else:
        So = S
        x_rows = x.reshape(B * S, D)
        if Dp != D:
            x_rows = jnp.pad(x_rows, ((0, 0), (0, Dp - D)))
        keep_rows = keep.reshape(B * S, 1) if has_mask else None

    M = B * So
    Din = x_rows.shape[1]                 # scale * Dp (lane-dense)
    itemsize = jnp.dtype(x.dtype).itemsize
    wsize = jnp.dtype(mxu_dtype).itemsize

    # ---- width- and generation-aware row tile --------------------------------
    row_io = (Din + Dp) * itemsize + (128 * itemsize if has_mask else 0)
    row_tmp = (3 * Dp + Hp) * 4           # f32 y/yn, h, out temporaries
    weight_bytes = ((scale + 4) * Dp + Hp) * 4 + 2 * Dp * Hp * wsize

    cap = _vmem_capacity_bytes()
    vmem_limit = max(min((cap * 3) // 4, 96 * 1024 * 1024), 32 * 1024 * 1024)
    tile_budget = max(vmem_limit - 2 * weight_bytes - (6 << 20), 4 << 20)

    if tm is None:
        per_row = 2 * row_io + row_tmp    # double-buffered in/out tiles + temps
        TM = min(tile_budget // per_row,
                 max((2 << 20) // max(row_io, 1), 256),   # >= ~2 MiB HBM / step
                 4096)
    else:
        TM = int(tm)
    TM = max(8, min(TM, _round_up(M, 8)))
    TM = (TM // 8) * 8
    if tm is None and TM >= M and M > 8:
        TM = _round_up((M + 1) // 2, 8)   # >= 2 grid steps (v7x has two TensorCores)

    M_pad = _round_up(M, TM)
    if M_pad != M:
        x_rows = jnp.pad(x_rows, ((0, M_pad - M), (0, 0)))
        if has_mask:
            keep_rows = jnp.pad(keep_rows, ((0, M_pad - M), (0, 0)))
    grid = (M_pad // TM,)

    # ---- lane-dense, zero-padded parameters (pad lanes must stay zero) -------
    g_p = _pad2(g.astype(jnp.float32), 1, Dp)
    bta_p = _pad2(bta.astype(jnp.float32), 1, Dp)
    w1_p = _pad2(w1, Dp, Hp).astype(mxu_dtype)
    b1_p = _pad2(b1.astype(jnp.float32), 1, Hp)
    w2_p = _pad2(w2, Hp, Dp).astype(mxu_dtype)
    b2_p = _pad2(b2.astype(jnp.float32), 1, Dp)

    args = [x_rows]
    data_specs = [pl.BlockSpec((TM, Din), lambda i: (i, 0))]
    if has_mask:
        args.append(keep_rows)
        data_specs.append(pl.BlockSpec((TM, keep_rows.shape[1]), lambda i: (i, 0)))
    weights = []
    if scale > 1:
        weights += [_pad2(cw.astype(jnp.float32), scale, Dp),
                    _pad2(cb.astype(jnp.float32), 1, Dp)]
    weights += [g_p, bta_p, w1_p, b1_p, w2_p, b2_p]
    args += weights

    kernel = _make_kernel(scale, D, Dp, use_skip=(scale == 1), has_mask=has_mask,
                          mxu_dtype=mxu_dtype, approx_gelu=approx_gelu)

    cost = pl.CostEstimate(
        flops=int(M) * (4 * Dp * Hp + 2 * scale * Dp + 10 * Dp),
        transcendentals=int(M) * Hp,
        bytes_accessed=int(itemsize * M_pad * (Din + Dp)
                           + (int(keep_rows.size) * itemsize if has_mask else 0)
                           + sum(int(a.size) * jnp.dtype(a.dtype).itemsize
                                 for a in weights)),
    )

    def run(weight_mode):
        def wspec(a):
            nd = a.ndim
            if weight_mode is None:
                return pl.BlockSpec(a.shape, lambda i: (0,) * nd)
            return pl.BlockSpec(a.shape, lambda i: (0,) * nd,
                                pipeline_mode=weight_mode)
        return pl.pallas_call(
            kernel,
            out_shape=jax.ShapeDtypeStruct((M_pad, Dp), x.dtype),
            grid=grid,
            in_specs=data_specs + [wspec(a) for a in weights],
            out_specs=pl.BlockSpec((TM, Dp), lambda i: (i, 0)),
            compiler_params=pltpu.CompilerParams(
                dimension_semantics=("parallel",),
                vmem_limit_bytes=int(vmem_limit)),
            cost_estimate=cost,
        )(*args)

    try:
        # Weights are never re-fetched across the row grid -> single-buffer them.
        out = run(pl.Buffered(1))
    except Exception:
        # TODO(synk): drop fallback once Buffered(1) weight blocks are universal.
        out = run(None)

    return out[:M, :D].reshape(B, So, D)


def time_scale_processor_ref(x, params, scale, mask=None):
    """Pure-JAX reference of the PyTorch forward (eval mode, f32, exact GELU)."""
    cw, cb, g, bta, w1, b1, w2, b2 = params
    B, S, D = x.shape
    x = x.astype(jnp.float32)
    if mask is not None:
        x = x * (~mask)[..., None].astype(jnp.float32)
    identity = x if scale == 1 else None
    if scale > 1:
        pad_s = (-S) % scale
        if pad_s:
            x = jnp.pad(x, ((0, 0), (0, pad_s), (0, 0)))
        So = x.shape[1] // scale
        xw = x.reshape(B, So, scale, D)
        x = jnp.einsum("bskd,kd->bsd", xw, cw,
                       precision=jax.lax.Precision.HIGHEST) + cb.reshape(D)
    mu = jnp.mean(x, -1, keepdims=True)
    var = jnp.mean(jnp.square(x - mu), -1, keepdims=True)
    xn = (x - mu) * jax.lax.rsqrt(var + 1e-5) * g.reshape(D) + bta.reshape(D)
    h = jnp.dot(xn, w1, precision=jax.lax.Precision.HIGHEST) + b1.reshape(-1)
    h = jax.nn.gelu(h, approximate=False)
    out = jnp.dot(h, w2, precision=jax.lax.Precision.HIGHEST) + b2.reshape(-1)
    if identity is not None:
        out = out + identity
    return out


def init_params(key, D, H, scale):
    """Deterministic synthetic parameter init (shapes follow the nn.Module)."""
    k1, k2, k3, k4, k5, k6 = jax.random.split(key, 6)
    if scale > 1:
        # Conv1d(D, D, kernel=scale, stride=scale, groups=D): weight [D,1,scale] -> stored [scale, D]
        cw = (jax.random.normal(k1, (scale, D)) * 0.1).astype(jnp.float32)
        cb = (jax.random.normal(k2, (1, D)) * 0.1).astype(jnp.float32)
    else:
        cw = jnp.zeros((1, D), jnp.float32)   # dummies (Identity downsample)
        cb = jnp.zeros((1, D), jnp.float32)
    g = jnp.ones((1, D), jnp.float32)         # LayerNorm weight
    bta = jnp.zeros((1, D), jnp.float32)      # LayerNorm bias
    w1 = (jax.random.normal(k3, (D, H)) * 0.05).astype(jnp.float32)  # Linear(D, H) stored [in, out]
    b1 = (jax.random.normal(k4, (1, H)) * 0.05).astype(jnp.float32)
    w2 = (jax.random.normal(k5, (H, D)) * 0.05).astype(jnp.float32)  # Linear(H, D)
    b2 = (jax.random.normal(k6, (1, D)) * 0.05).astype(jnp.float32)
    return (cw, cb, g, bta, w1, b1, w2, b2)


if __name__ == "__main__":
    key = jax.random.PRNGKey(0)
    B, S, D, H = 2, 16, 32, 64
    kx, km, kp = jax.random.split(key, 3)

    x = jax.random.normal(kx, (B, S, D), jnp.float32)
    mask = jax.random.bernoulli(km, 0.2, (B, S))        # True == masked out

    params2 = init_params(kp, D, H, scale=2)
    params1 = init_params(kp, D, H, scale=1)

    # Fast path (default): bf16 MXU operands + tanh GELU.
    y2 = time_scale_processor(x, params2, scale=2, mask=mask)
    r2 = time_scale_processor_ref(x, params2, scale=2, mask=mask)
    y1 = time_scale_processor(x, params1, scale=1, mask=mask)
    r1 = time_scale_processor_ref(x, params1, scale=1, mask=mask)

    # Exact-parity path: f32 MXU operands + erf GELU (matches PyTorch closely).
    y2e = time_scale_processor(x, params2, scale=2, mask=mask,
                               mxu_dtype=jnp.float32, approx_gelu=False)
    y1e = time_scale_processor(x, params1, scale=1, mask=mask,
                               mxu_dtype=jnp.float32, approx_gelu=False)

    # No-mask path, and explicit small tile to exercise row-padding/multi-step grid.
    y1n = time_scale_processor(x, params1, scale=1, mask=None)
    r1n = time_scale_processor_ref(x, params1, scale=1, mask=None)
    y1c = time_scale_processor(x, params1, scale=1, mask=mask, tm=24)

    # bf16 activations at the HBM boundary (f32 LN / accumulation inside kernel).
    y2b = time_scale_processor(x.astype(jnp.bfloat16), params2, scale=2, mask=mask)

    jax.block_until_ready((y1, y2, y1e, y2e, y1n, y1c, y2b))
    assert y2.shape == (B, S // 2, D), y2.shape
    assert y1.shape == (B, S, D), y1.shape
    assert y2b.shape == (B, S // 2, D) and y2b.dtype == jnp.bfloat16
    assert bool(jnp.all(jnp.isfinite(y1))) and bool(jnp.all(jnp.isfinite(y2)))
    assert float(jnp.max(jnp.abs(y2e - r2))) < 5e-3    # exact path, tight tolerance
    assert float(jnp.max(jnp.abs(y1e - r1))) < 5e-3
    assert float(jnp.max(jnp.abs(y2 - r2))) < 3e-2     # bf16 MXU + tanh GELU
    assert float(jnp.max(jnp.abs(y1 - r1))) < 3e-2
    assert float(jnp.max(jnp.abs(y1n - r1n))) < 3e-2
    assert float(jnp.max(jnp.abs(y1c - r1))) < 3e-2
    print("KERNEL_OK")
</pallas_src>

<mosaic_0001>
module attributes {stable_mosaic.version = 11 : i64} {
  func.func @kernel(%arg0: i32, %arg1: memref<8x256xf32, #tpu.memory_space<vmem>>, %arg2: memref<8x2xf32, #tpu.memory_space<vmem>>, %arg3: memref<2x128xf32, #tpu.memory_space<vmem>>, %arg4: memref<1x128xf32, #tpu.memory_space<vmem>>, %arg5: memref<1x128xf32, #tpu.memory_space<vmem>>, %arg6: memref<1x128xf32, #tpu.memory_space<vmem>>, %arg7: memref<128x128xbf16, #tpu.memory_space<vmem>>, %arg8: memref<1x128xf32, #tpu.memory_space<vmem>>, %arg9: memref<128x128xbf16, #tpu.memory_space<vmem>>, %arg10: memref<1x128xf32, #tpu.memory_space<vmem>>, %arg11: memref<8x128xf32, #tpu.memory_space<vmem>>) attributes {dimension_semantics = [#tpu.dimension_semantics<parallel>], iteration_bounds = array<i64: 2>, scalar_prefetch = 0 : i64, scratch_operands = 0 : i64, tpu.core_type = #tpu.core_type<tc>, window_params = [{transform_indices = @transform_0, window_bounds = array<i64: 8, 256>}, {transform_indices = @transform_1, window_bounds = array<i64: 8, 2>}, {pipeline_mode = #tpu.pipeline_mode<synchronous>, transform_indices = @transform_2, window_bounds = array<i64: 2, 128>}, {pipeline_mode = #tpu.pipeline_mode<synchronous>, transform_indices = @transform_3, window_bounds = array<i64: 1, 128>}, {pipeline_mode = #tpu.pipeline_mode<synchronous>, transform_indices = @transform_4, window_bounds = array<i64: 1, 128>}, {pipeline_mode = #tpu.pipeline_mode<synchronous>, transform_indices = @transform_5, window_bounds = array<i64: 1, 128>}, {pipeline_mode = #tpu.pipeline_mode<synchronous>, transform_indices = @transform_6, window_bounds = array<i64: 128, 128>}, {pipeline_mode = #tpu.pipeline_mode<synchronous>, transform_indices = @transform_7, window_bounds = array<i64: 1, 128>}, {pipeline_mode = #tpu.pipeline_mode<synchronous>, transform_indices = @transform_8, window_bounds = array<i64: 128, 128>}, {pipeline_mode = #tpu.pipeline_mode<synchronous>, transform_indices = @transform_9, window_bounds = array<i64: 1, 128>}, {transform_indices = @transform_10, window_bounds = array<i64: 8, 128>}]} {
    %c0 = arith.constant 0 : index
    %c0_0 = arith.constant 0 : index
    %0 = vector.load %arg1[%c0, %c0_0] : memref<8x256xf32, #tpu.memory_space<vmem>>, vector<8x128xf32>
    %c0_1 = arith.constant 0 : index
    %c0_2 = arith.constant 0 : index
    %1 = vector.load %arg2[%c0_1, %c0_2] : memref<8x2xf32, #tpu.memory_space<vmem>>, vector<8x1xf32>
    %2 = vector.broadcast %1 : vector<8x1xf32> to vector<8x128xf32>
    %3 = arith.mulf %0, %2 : vector<8x128xf32>
    %c0_3 = arith.constant 0 : index
    %c0_4 = arith.constant 0 : index
    %4 = vector.load %arg3[%c0_3, %c0_4] : memref<2x128xf32, #tpu.memory_space<vmem>>, vector<1x128xf32>
    %5 = vector.broadcast %4 : vector<1x128xf32> to vector<8x128xf32>
    %6 = arith.mulf %3, %5 : vector<8x128xf32>
    %c0_5 = arith.constant 0 : index
    %c128 = arith.constant 128 : index
    %7 = vector.load %arg1[%c0_5, %c128] : memref<8x256xf32, #tpu.memory_space<vmem>>, vector<8x128xf32>
    %c0_6 = arith.constant 0 : index
    %c1 = arith.constant 1 : index
    %8 = vector.load %arg2[%c0_6, %c1] : memref<8x2xf32, #tpu.memory_space<vmem>>, vector<8x1xf32>
    %9 = vector.broadcast %8 : vector<8x1xf32> to vector<8x128xf32>
    %10 = arith.mulf %7, %9 : vector<8x128xf32>
    %c1_7 = arith.constant 1 : index
    %c0_8 = arith.constant 0 : index
    %11 = vector.load %arg3[%c1_7, %c0_8] : memref<2x128xf32, #tpu.memory_space<vmem>>, vector<1x128xf32>
    %12 = vector.broadcast %11 : vector<1x128xf32> to vector<8x128xf32>
    %13 = arith.mulf %10, %12 : vector<8x128xf32>
    %14 = arith.addf %6, %13 : vector<8x128xf32>
    %c0_9 = arith.constant 0 : index
    %c0_10 = arith.constant 0 : index
    %15 = vector.load %arg4[%c0_9, %c0_10] : memref<1x128xf32, #tpu.memory_space<vmem>>, vector<1x128xf32>
    %16 = vector.broadcast %15 : vector<1x128xf32> to vector<8x128xf32>
    %17 = arith.addf %14, %16 : vector<8x128xf32>
    %cst = arith.constant dense<0.000000e+00> : vector<8xf32>
    %18 = vector.multi_reduction <add>, %17, %cst [1] : vector<8x128xf32> to vector<8xf32>
    %19 = vector.shape_cast %18 : vector<8xf32> to vector<8x1xf32>
    %20 = arith.mulf %17, %17 : vector<8x128xf32>
    %cst_11 = arith.constant dense<0.000000e+00> : vector<8xf32>
    %21 = vector.multi_reduction <add>, %20, %cst_11 [1] : vector<8x128xf32> to vector<8xf32>
    %22 = vector.shape_cast %21 : vector<8xf32> to vector<8x1xf32>
    %cst_12 = arith.constant 3.125000e-02 : f32
    %23 = vector.broadcast %cst_12 : f32 to vector<8x1xf32>
    %24 = arith.mulf %19, %23 : vector<8x1xf32>
    %cst_13 = arith.constant 3.125000e-02 : f32
    %25 = vector.broadcast %cst_13 : f32 to vector<8x1xf32>
    %26 = arith.mulf %22, %25 : vector<8x1xf32>
    %27 = arith.mulf %24, %24 : vector<8x1xf32>
    %28 = arith.subf %26, %27 : vector<8x1xf32>
    %29 = vector.broadcast %24 : vector<8x1xf32> to vector<8x128xf32>
    %30 = arith.subf %17, %29 : vector<8x128xf32>
    %cst_14 = arith.constant 9.99999974E-6 : f32
    %31 = vector.broadcast %cst_14 : f32 to vector<8x1xf32>
    %32 = arith.addf %28, %31 : vector<8x1xf32>
    %33 = math.rsqrt %32 : vector<8x1xf32>
    %34 = vector.broadcast %33 : vector<8x1xf32> to vector<8x128xf32>
    %35 = arith.mulf %30, %34 : vector<8x128xf32>
    %c0_15 = arith.constant 0 : index
    %c0_16 = arith.constant 0 : index
    %36 = vector.load %arg5[%c0_15, %c0_16] : memref<1x128xf32, #tpu.memory_space<vmem>>, vector<1x128xf32>
    %37 = vector.broadcast %36 : vector<1x128xf32> to vector<8x128xf32>
    %38 = arith.mulf %35, %37 : vector<8x128xf32>
    %c0_17 = arith.constant 0 : index
    %c0_18 = arith.constant 0 : index
    %39 = vector.load %arg6[%c0_17, %c0_18] : memref<1x128xf32, #tpu.memory_space<vmem>>, vector<1x128xf32>
    %40 = vector.broadcast %39 : vector<1x128xf32> to vector<8x128xf32>
    %41 = arith.addf %38, %40 : vector<8x128xf32>
    %42 = arith.truncf %41 : vector<8x128xf32> to vector<8x128xbf16>
    %c0_19 = arith.constant 0 : index
    %c0_20 = arith.constant 0 : index
    %43 = vector.load %arg7[%c0_19, %c0_20] : memref<128x128xbf16, #tpu.memory_space<vmem>>, vector<128x128xbf16>
    %cst_21 = arith.constant dense<0.000000e+00> : vector<8x128xf32>
    %44 = tpu.matmul %42, %43, %cst_21 {dimension_numbers = #tpu.dot_dimension_numbers<[1], [0], [0], [1], [0, 0, 1, 1], [], []>} : vector<8x128xbf16>, vector<128x128xbf16>, vector<8x128xf32> -> vector<8x128xf32>
    %c0_22 = arith.constant 0 : index
    %c0_23 = arith.constant 0 : index
    %45 = vector.load %arg8[%c0_22, %c0_23] : memref<1x128xf32, #tpu.memory_space<vmem>>, vector<1x128xf32>
    %46 = vector.broadcast %45 : vector<1x128xf32> to vector<8x128xf32>
    %47 = arith.addf %44, %46 : vector<8x128xf32>
    %48 = arith.mulf %47, %47 : vector<8x128xf32>
    %49 = arith.mulf %47, %48 : vector<8x128xf32>
    %cst_24 = arith.constant 4.471500e-02 : f32
    %50 = vector.broadcast %cst_24 : f32 to vector<8x128xf32>
    %51 = arith.mulf %50, %49 : vector<8x128xf32>
    %52 = arith.addf %47, %51 : vector<8x128xf32>
    %cst_25 = arith.constant 0.797884583 : f32
    %53 = vector.broadcast %cst_25 : f32 to vector<8x128xf32>
    %54 = arith.mulf %53, %52 : vector<8x128xf32>
    %55 = math.tanh %54 : vector<8x128xf32>
    %cst_26 = arith.constant 1.000000e+00 : f32
    %56 = vector.broadcast %cst_26 : f32 to vector<8x128xf32>
    %57 = arith.addf %56, %55 : vector<8x128xf32>
    %cst_27 = arith.constant 5.000000e-01 : f32
    %58 = vector.broadcast %cst_27 : f32 to vector<8x128xf32>
    %59 = arith.mulf %58, %57 : vector<8x128xf32>
    %60 = arith.mulf %47, %59 : vector<8x128xf32>
    %61 = arith.truncf %60 : vector<8x128xf32> to vector<8x128xbf16>
    %c0_28 = arith.constant 0 : index
    %c0_29 = arith.constant 0 : index
    %62 = vector.load %arg9[%c0_28, %c0_29] : memref<128x128xbf16, #tpu.memory_space<vmem>>, vector<128x128xbf16>
    %cst_30 = arith.constant dense<0.000000e+00> : vector<8x128xf32>
    %63 = tpu.matmul %61, %62, %cst_30 {dimension_numbers = #tpu.dot_dimension_numbers<[1], [0], [0], [1], [0, 0, 1, 1], [], []>} : vector<8x128xbf16>, vector<128x128xbf16>, vector<8x128xf32> -> vector<8x128xf32>
    %c0_31 = arith.constant 0 : index
    %c0_32 = arith.constant 0 : index
    %64 = vector.load %arg10[%c0_31, %c0_32] : memref<1x128xf32, #tpu.memory_space<vmem>>, vector<1x128xf32>
    %65 = vector.broadcast %64 : vector<1x128xf32> to vector<8x128xf32>
    %66 = arith.addf %63, %65 : vector<8x128xf32>
    %c0_33 = arith.constant 0 : index
    %c0_34 = arith.constant 0 : index
    %67 = vector.load %arg11[%c0_33, %c0_34] : memref<8x128xf32, #tpu.memory_space<vmem>>, vector<8x128xf32>
    tpu.vector_store %arg11[%c0_33, %c0_34], %66 {strides = array<i32>} : memref<8x128xf32, #tpu.memory_space<vmem>>, vector<8x128xf32>,
    return
  }
  func.func @transform_0(%arg0: i32) -> (i32, i32) {
    %c0_i32 = arith.constant 0 : i32
    %c0_i32_0 = arith.constant 0 : i32
    return %arg0, %c0_i32 : i32, i32
  }
  func.func @transform_1(%arg0: i32) -> (i32, i32) {
    %c0_i32 = arith.constant 0 : i32
    %c0_i32_0 = arith.constant 0 : i32
    return %arg0, %c0_i32 : i32, i32
  }
  func.func @transform_2(%arg0: i32) -> (i32, i32) {
    %c0_i32 = arith.constant 0 : i32
    %c0_i32_0 = arith.constant 0 : i32
    %c0_i32_1 = arith.constant 0 : i32
    return %c0_i32, %c0_i32_0 : i32, i32
  }
  func.func @transform_3(%arg0: i32) -> (i32, i32) {
    %c0_i32 = arith.constant 0 : i32
    %c0_i32_0 = arith.constant 0 : i32
    %c0_i32_1 = arith.constant 0 : i32
    return %c0_i32, %c0_i32_0 : i32, i32
  }
  func.func @transform_4(%arg0: i32) -> (i32, i32) {
    %c0_i32 = arith.constant 0 : i32
    %c0_i32_0 = arith.constant 0 : i32
    %c0_i32_1 = arith.constant 0 : i32
    return %c0_i32, %c0_i32_0 : i32, i32
  }
  func.func @transform_5(%arg0: i32) -> (i32, i32) {
    %c0_i32 = arith.constant 0 : i32
    %c0_i32_0 = arith.constant 0 : i32
    %c0_i32_1 = arith.constant 0 : i32
    return %c0_i32, %c0_i32_0 : i32, i32
  }
  func.func @transform_6(%arg0: i32) -> (i32, i32) {
    %c0_i32 = arith.constant 0 : i32
    %c0_i32_0 = arith.constant 0 : i32
    %c0_i32_1 = arith.constant 0 : i32
    return %c0_i32, %c0_i32_0 : i32, i32
  }
  func.func @transform_7(%arg0: i32) -> (i32, i32) {
    %c0_i32 = arith.constant 0 : i32
    %c0_i32_0 = arith.constant 0 : i32
    %c0_i32_1 = arith.constant 0 : i32
    return %c0_i32, %c0_i32_0 : i32, i32
  }
  func.func @transform_8(%arg0: i32) -> (i32, i32) {
    %c0_i32 = arith.constant 0 : i32
    %c0_i32_0 = arith.constant 0 : i32
    %c0_i32_1 = arith.constant 0 : i32
    return %c0_i32, %c0_i32_0 : i32, i32
  }
  func.func @transform_9(%arg0: i32) -> (i32, i32) {
    %c0_i32 = arith.constant 0 : i32
    %c0_i32_0 = arith.constant 0 : i32
    %c0_i32_1 = arith.constant 0 : i32
    return %c0_i32, %c0_i32_0 : i32, i32
  }
  func.func @transform_10(%arg0: i32) -> (i32, i32) {
    %c0_i32 = arith.constant 0 : i32
    %c0_i32_0 = arith.constant 0 : i32
    return %arg0, %c0_i32 : i32, i32
  }
}

module attributes {stable_mosaic.version = 11 : i64} {
  func.func @kernel(%arg0: i32, %arg1: memref<8x256xf32, #tpu.memory_space<vmem>>, %arg2: memref<8x2xf32, #tpu.memory_space<vmem>>, %arg3: memref<2x128xf32, #tpu.memory_space<vmem>>, %arg4: memref<1x128xf32, #tpu.memory_space<vmem>>, %arg5: memref<1x128xf32, #tpu.memory_space<vmem>>, %arg6: memref<1x128xf32, #tpu.memory_space<vmem>>, %arg7: memref<128x128xbf16, #tpu.memory_space<vmem>>, %arg8: memref<1x128xf32, #tpu.memory_space<vmem>>, %arg9: memref<128x128xbf16, #tpu.memory_space<vmem>>, %arg10: memref<1x128xf32, #tpu.memory_space<vmem>>, %arg11: memref<8x128xf32, #tpu.memory_space<vmem>>) attributes {dimension_semantics = [#tpu.dimension_semantics<parallel>], iteration_bounds = array<i64: 2>, scalar_prefetch = 0 : i64, scratch_operands = 0 : i64, tpu.core_type = #tpu.core_type<tc>, window_params = [{transform_indices = @transform_0, window_bounds = array<i64: 8, 256>}, {transform_indices = @transform_1, window_bounds = array<i64: 8, 2>}, {pipeline_mode = #tpu.pipeline_mode<synchronous>, transform_indices = @transform_2, window_bounds = array<i64: 2, 128>}, {pipeline_mode = #tpu.pipeline_mode<synchronous>, transform_indices = @transform_3, window_bounds = array<i64: 1, 128>}, {pipeline_mode = #tpu.pipeline_mode<synchronous>, transform_indices = @transform_4, window_bounds = array<i64: 1, 128>}, {pipeline_mode = #tpu.pipeline_mode<synchronous>, transform_indices = @transform_5, window_bounds = array<i64: 1, 128>}, {pipeline_mode = #tpu.pipeline_mode<synchronous>, transform_indices = @transform_6, window_bounds = array<i64: 128, 128>}, {pipeline_mode = #tpu.pipeline_mode<synchronous>, transform_indices = @transform_7, window_bounds = array<i64: 1, 128>}, {pipeline_mode = #tpu.pipeline_mode<synchronous>, transform_indices = @transform_8, window_bounds = array<i64: 128, 128>}, {pipeline_mode = #tpu.pipeline_mode<synchronous>, transform_indices = @transform_9, window_bounds = array<i64: 1, 128>}, {transform_indices = @transform_10, window_bounds = array<i64: 8, 128>}]} {
    %c0 = arith.constant 0 : index
    %c0_0 = arith.constant 0 : index
    %0 = vector.load %arg1[%c0, %c0_0] : memref<8x256xf32, #tpu.memory_space<vmem>>, vector<8x128xf32>
    %c0_1 = arith.constant 0 : index
    %c0_2 = arith.constant 0 : index
    %1 = vector.load %arg2[%c0_1, %c0_2] : memref<8x2xf32, #tpu.memory_space<vmem>>, vector<8x1xf32>
    %2 = vector.broadcast %1 : vector<8x1xf32> to vector<8x128xf32>
    %3 = arith.mulf %0, %2 : vector<8x128xf32>
    %c0_3 = arith.constant 0 : index
    %c0_4 = arith.constant 0 : index
    %4 = vector.load %arg3[%c0_3, %c0_4] : memref<2x128xf32, #tpu.memory_space<vmem>>, vector<1x128xf32>
    %5 = vector.broadcast %4 : vector<1x128xf32> to vector<8x128xf32>
    %6 = arith.mulf %3, %5 : vector<8x128xf32>
    %c0_5 = arith.constant 0 : index
    %c128 = arith.constant 128 : index
    %7 = vector.load %arg1[%c0_5, %c128] : memref<8x256xf32, #tpu.memory_space<vmem>>, vector<8x128xf32>
    %c0_6 = arith.constant 0 : index
    %c1 = arith.constant 1 : index
    %8 = vector.load %arg2[%c0_6, %c1] : memref<8x2xf32, #tpu.memory_space<vmem>>, vector<8x1xf32>
    %9 = vector.broadcast %8 : vector<8x1xf32> to vector<8x128xf32>
    %10 = arith.mulf %7, %9 : vector<8x128xf32>
    %c1_7 = arith.constant 1 : index
    %c0_8 = arith.constant 0 : index
    %11 = vector.load %arg3[%c1_7, %c0_8] : memref<2x128xf32, #tpu.memory_space<vmem>>, vector<1x128xf32>
    %12 = vector.broadcast %11 : vector<1x128xf32> to vector<8x128xf32>
    %13 = arith.mulf %10, %12 : vector<8x128xf32>
    %14 = arith.addf %6, %13 : vector<8x128xf32>
    %c0_9 = arith.constant 0 : index
    %c0_10 = arith.constant 0 : index
    %15 = vector.load %arg4[%c0_9, %c0_10] : memref<1x128xf32, #tpu.memory_space<vmem>>, vector<1x128xf32>
    %16 = vector.broadcast %15 : vector<1x128xf32> to vector<8x128xf32>
    %17 = arith.addf %14, %16 : vector<8x128xf32>
    %cst = arith.constant dense<0.000000e+00> : vector<8xf32>
    %18 = vector.multi_reduction <add>, %17, %cst [1] : vector<8x128xf32> to vector<8xf32>
    %19 = vector.shape_cast %18 : vector<8xf32> to vector<8x1xf32>
    %20 = arith.mulf %17, %17 : vector<8x128xf32>
    %cst_11 = arith.constant dense<0.000000e+00> : vector<8xf32>
    %21 = vector.multi_reduction <add>, %20, %cst_11 [1] : vector<8x128xf32> to vector<8xf32>
    %22 = vector.shape_cast %21 : vector<8xf32> to vector<8x1xf32>
    %cst_12 = arith.constant 3.125000e-02 : f32
    %23 = vector.broadcast %cst_12 : f32 to vector<8x1xf32>
    %24 = arith.mulf %19, %23 : vector<8x1xf32>
    %cst_13 = arith.constant 3.125000e-02 : f32
    %25 = vector.broadcast %cst_13 : f32 to vector<8x1xf32>
    %26 = arith.mulf %22, %25 : vector<8x1xf32>
    %27 = arith.mulf %24, %24 : vector<8x1xf32>
    %28 = arith.subf %26, %27 : vector<8x1xf32>
    %29 = vector.broadcast %24 : vector<8x1xf32> to vector<8x128xf32>
    %30 = arith.subf %17, %29 : vector<8x128xf32>
    %cst_14 = arith.constant 9.99999974E-6 : f32
    %31 = vector.broadcast %cst_14 : f32 to vector<8x1xf32>
    %32 = arith.addf %28, %31 : vector<8x1xf32>
    %33 = math.rsqrt %32 : vector<8x1xf32>
    %34 = vector.broadcast %33 : vector<8x1xf32> to vector<8x128xf32>
    %35 = arith.mulf %30, %34 : vector<8x128xf32>
    %c0_15 = arith.constant 0 : index
    %c0_16 = arith.constant 0 : index
    %36 = vector.load %arg5[%c0_15, %c0_16] : memref<1x128xf32, #tpu.memory_space<vmem>>, vector<1x128xf32>
    %37 = vector.broadcast %36 : vector<1x128xf32> to vector<8x128xf32>
    %38 = arith.mulf %35, %37 : vector<8x128xf32>
    %c0_17 = arith.constant 0 : index
    %c0_18 = arith.constant 0 : index
    %39 = vector.load %arg6[%c0_17, %c0_18] : memref<1x128xf32, #tpu.memory_space<vmem>>, vector<1x128xf32>
    %40 = vector.broadcast %39 : vector<1x128xf32> to vector<8x128xf32>
    %41 = arith.addf %38, %40 : vector<8x128xf32>
    %42 = arith.truncf %41 : vector<8x128xf32> to vector<8x128xbf16>
    %c0_19 = arith.constant 0 : index
    %c0_20 = arith.constant 0 : index
    %43 = vector.load %arg7[%c0_19, %c0_20] : memref<128x128xbf16, #tpu.memory_space<vmem>>, vector<128x128xbf16>
    %cst_21 = arith.constant dense<0.000000e+00> : vector<8x128xf32>
    %44 = tpu.matmul %42, %43, %cst_21 {dimension_numbers = #tpu.dot_dimension_numbers<[1], [0], [0], [1], [0, 0, 1, 1], [], []>} : vector<8x128xbf16>, vector<128x128xbf16>, vector<8x128xf32> -> vector<8x128xf32>
    %c0_22 = arith.constant 0 : index
    %c0_23 = arith.constant 0 : index
    %45 = vector.load %arg8[%c0_22, %c0_23] : memref<1x128xf32, #tpu.memory_space<vmem>>, vector<1x128xf32>
    %46 = vector.broadcast %45 : vector<1x128xf32> to vector<8x128xf32>
    %47 = arith.addf %44, %46 : vector<8x128xf32>
    %48 = arith.mulf %47, %47 : vector<8x128xf32>
    %49 = arith.mulf %47, %48 : vector<8x128xf32>
    %cst_24 = arith.constant 4.471500e-02 : f32
    %50 = vector.broadcast %cst_24 : f32 to vector<8x128xf32>
    %51 = arith.mulf %50, %49 : vector<8x128xf32>
    %52 = arith.addf %47, %51 : vector<8x128xf32>
    %cst_25 = arith.constant 0.797884583 : f32
    %53 = vector.broadcast %cst_25 : f32 to vector<8x128xf32>
    %54 = arith.mulf %53, %52 : vector<8x128xf32>
    %55 = math.tanh %54 : vector<8x128xf32>
    %cst_26 = arith.constant 1.000000e+00 : f32
    %56 = vector.broadcast %cst_26 : f32 to vector<8x128xf32>
    %57 = arith.addf %56, %55 : vector<8x128xf32>
    %cst_27 = arith.constant 5.000000e-01 : f32
    %58 = vector.broadcast %cst_27 : f32 to vector<8x128xf32>
    %59 = arith.mulf %58, %57 : vector<8x128xf32>
    %60 = arith.mulf %47, %59 : vector<8x128xf32>
    %61 = arith.truncf %60 : vector<8x128xf32> to vector<8x128xbf16>
    %c0_28 = arith.constant 0 : index
    %c0_29 = arith.constant 0 : index
    %62 = vector.load %arg9[%c0_28, %c0_29] : memref<128x128xbf16, #tpu.memory_space<vmem>>, vector<128x128xbf16>
    %cst_30 = arith.constant dense<0.000000e+00> : vector<8x128xf32>
    %63 = tpu.matmul %61, %62, %cst_30 {dimension_numbers = #tpu.dot_dimension_numbers<[1], [0], [0], [1], [0, 0, 1, 1], [], []>} : vector<8x128xbf16>, vector<128x128xbf16>, vector<8x128xf32> -> vector<8x128xf32>
    %c0_31 = arith.constant 0 : index
    %c0_32 = arith.constant 0 : index
    %64 = vector.load %arg10[%c0_31, %c0_32] : memref<1x128xf32, #tpu.memory_space<vmem>>, vector<1x128xf32>
    %65 = vector.broadcast %64 : vector<1x128xf32> to vector<8x128xf32>
    %66 = arith.addf %63, %65 : vector<8x128xf32>
    %c0_33 = arith.constant 0 : index
    %c0_34 = arith.constant 0 : index
    %67 = vector.load %arg11[%c0_33, %c0_34] : memref<8x128xf32, #tpu.memory_space<vmem>>, vector<8x128xf32>
    tpu.vector_store %arg11[%c0_33, %c0_34], %66 {strides = array<i32>} : memref<8x128xf32, #tpu.memory_space<vmem>>, vector<8x128xf32>,
    return
  }
  func.func @transform_0(%arg0: i32) -> (i32, i32) {
    %c0_i32 = arith.constant 0 : i32
    %c0_i32_0 = arith.constant 0 : i32
    return %arg0, %c0_i32 : i32, i32
  }
  func.func @transform_1(%arg0: i32) -> (i32, i32) {
    %c0_i32 = arith.constant 0 : i32
    %c0_i32_0 = arith.constant 0 : i32
    return %arg0, %c0_i32 : i32, i32
  }
  func.func @transform_2(%arg0: i32) -> (i32, i32) {
    %c0_i32 = arith.constant 0 : i32
    %c0_i32_0 = arith.constant 0 : i32
    %c0_i32_1 = arith.constant 0 : i32
    return %c0_i32, %c0_i32_0 : i32, i32
  }
  func.func @transform_3(%arg0: i32) -> (i32, i32) {
    %c0_i32 = arith.constant 0 : i32
    %c0_i32_0 = arith.constant 0 : i32
    %c0_i32_1 = arith.constant 0 : i32
    return %c0_i32, %c0_i32_0 : i32, i32
  }
  func.func @transform_4(%arg0: i32) -> (i32, i32) {
    %c0_i32 = arith.constant 0 : i32
    %c0_i32_0 = arith.constant 0 : i32
    %c0_i32_1 = arith.constant 0 : i32
    return %c0_i32, %c0_i32_0 : i32, i32
  }
  func.func @transform_5(%arg0: i32) -> (i32, i32) {
    %c0_i32 = arith.constant 0 : i32
    %c0_i32_0 = arith.constant 0 : i32
    %c0_i32_1 = arith.constant 0 : i32
    return %c0_i32, %c0_i32_0 : i32, i32
  }
  func.func @transform_6(%arg0: i32) -> (i32, i32) {
    %c0_i32 = arith.constant 0 : i32
    %c0_i32_0 = arith.constant 0 : i32
    %c0_i32_1 = arith.constant 0 : i32
    return %c0_i32, %c0_i32_0 : i32, i32
  }
  func.func @transform_7(%arg0: i32) -> (i32, i32) {
    %c0_i32 = arith.constant 0 : i32
    %c0_i32_0 = arith.constant 0 : i32
    %c0_i32_1 = arith.constant 0 : i32
    return %c0_i32, %c0_i32_0 : i32, i32
  }
  func.func @transform_8(%arg0: i32) -> (i32, i32) {
    %c0_i32 = arith.constant 0 : i32
    %c0_i32_0 = arith.constant 0 : i32
    %c0_i32_1 = arith.constant 0 : i32
    return %c0_i32, %c0_i32_0 : i32, i32
  }
  func.func @transform_9(%arg0: i32) -> (i32, i32) {
    %c0_i32 = arith.constant 0 : i32
    %c0_i32_0 = arith.constant 0 : i32
    %c0_i32_1 = arith.constant 0 : i32
    return %c0_i32, %c0_i32_0 : i32, i32
  }
  func.func @transform_10(%arg0: i32) -> (i32, i32) {
    %c0_i32 = arith.constant 0 : i32
    %c0_i32_0 = arith.constant 0 : i32
    return %arg0, %c0_i32 : i32, i32
  }
}

</mosaic_0001>

<llo_original>
// kernel: tpu_custom_call.1
$region0: #{tpu_custom_call.1}
  #allocation0 [shape = 'u32[]', space=smem, size = 0x4, offset = 0x4, fixed_abs, tag = 'smem constant byte address 0x4 - core index']
  #allocation1 [shape = 'u32[144,128]{1,0:T(1,128)}', space=vmem, size = 0x12000, scoped, tag = 'internal scratch']
  %s0 = inlined_call_operand.hbm [shape: f32[16,256], index: 0, kind: input, shape index: {}]
  %s1 = inlined_call_operand.vmem [shape: f32[16,2], index: 1, kind: input, shape index: {}]
  %s2 = inlined_call_operand.vmem [shape: f32[2,128], index: 2, kind: input, shape index: {}]
  %s3 = inlined_call_operand.vmem [shape: f32[1,128], index: 3, kind: input, shape index: {}]
  %s4 = inlined_call_operand.vmem [shape: f32[1,128], index: 4, kind: input, shape index: {}]
  %s5 = inlined_call_operand.vmem [shape: f32[1,128], index: 5, kind: input, shape index: {}]
  %s6 = inlined_call_operand.hbm [shape: bf16[128,128], index: 6, kind: input, shape index: {}]
  %s7 = inlined_call_operand.vmem [shape: f32[1,128], index: 7, kind: input, shape index: {}]
  %s8 = inlined_call_operand.hbm [shape: bf16[128,128], index: 8, kind: input, shape index: {}]
  %s9 = inlined_call_operand.vmem [shape: f32[1,128], index: 9, kind: input, shape index: {}]
  %s10 = inlined_call_operand.hbm [shape: f32[16,128], index: 10, kind: output, shape index: {}]
  %s11 = sld [smem:[#allocation0]]
  $region85: #{tpu_custom_call.1} parent=0
    _
  %s13 = ssub.s32 1, %s11
  %s14 = scalar_select 0, %s13, %s11
  $region1: #{tpu_custom_call.1} parent=0
    #allocation2 [shape = 'u8[16384]{0}', space=vmem, size = 0x4000, scoped, tag = 'input window, operand 0']
    #allocation3 [shape = 's32[2]{0}', space=sflag, size = 0x8, scoped, tag = 'scoped memory for tpu_custom_call.1']
    #allocation4 [shape = 's32[2]{0}', space=sflag, size = 0x8, scoped, tag = 'scoped memory for tpu_custom_call.1']
    #allocation5 [shape = 'u8[32768]{0}', space=vmem, size = 0x8000, scoped, tag = 'input window, operand 6, single buffered']
    #allocation6 [shape = 's32[1]{0}', space=sflag, size = 0x4, scoped, tag = 'scoped memory for tpu_custom_call.1']
    #allocation7 [shape = 'u8[32768]{0}', space=vmem, size = 0x8000, scoped, tag = 'input window, operand 8, single buffered']
    #allocation8 [shape = 'u8[8192]{0}', space=vmem, size = 0x2000, scoped, tag = 'output window, operand 0']
    %15 = vsyncpa [#allocation3], 0
    %s16 = scalar_lea.sflag [#allocation3], 1
    %17 = vsyncpa %s16, 0
    %18 = vsyncpa [#allocation6], 0
    %19 = vsyncpa [#allocation4], 0
    %s20 = scalar_lea.sflag [#allocation4], 1
    %21 = vsyncpa %s20, 0
    loop: start=0, step=1, limit=4
    $region2: #{tpu_custom_call.1} parent=1 // loop_pre_header
      _
    $region3: #{tpu_custom_call.1} parent=1 // loop_header
      %s23 = sphi 0, %s27
      %p24 = scmp.ge.s32.totalorder %s23, 4
      %s33 = sphi 0, %s35
      %s36 = sphi 0, %s33
      %s37 = sphi 0, %s36
      %s53 = sphi 0, %s37
      %s59 = sphi 0, %s61
      %s62 = sphi 0, %s59
      %s63 = sphi 0, %s62
      %s79 = sphi 0, %s63
      %s83 = sphi 0, %s83
      %s85 = sphi 0, %s83
      %s86 = sphi 0, %s85
      %s100 = sphi 0, %s86
      %s104 = sphi 0, %s104
      %s106 = sphi 0, %s104
      %s107 = sphi 0, %s106
      %s121 = sphi 0, %s107
      %s125 = sphi 0, %s125
      %s127 = sphi 0, %s125
      %s128 = sphi 0, %s127
      %s142 = sphi 0, %s128
      %s146 = sphi 0, %s146
      %s148 = sphi 0, %s146
      %s149 = sphi 0, %s148
      %s163 = sphi 0, %s149
      %s167 = sphi 0, %s167
      %s169 = sphi 0, %s167
      %s170 = sphi 0, %s169
      %s184 = sphi 0, %s170
      %s188 = sphi 0, %s188
      %s190 = sphi 0, %s188
      %s191 = sphi 0, %s190
      %s205 = sphi 0, %s191
      %s209 = sphi 0, %s209
      %s211 = sphi 0, %s209
      %s212 = sphi 0, %s211
      %s226 = sphi 0, %s212
      %s230 = sphi 0, %s230
      %s232 = sphi 0, %s230
      %s233 = sphi 0, %s232
      %s247 = sphi 0, %s233
      %s253 = sphi 0, %s255
      %s256 = sphi 0, %s253
      %s257 = sphi 0, %s256
      %s273 = sphi 0, %s257
    $region4: #{tpu_custom_call.1} parent=1 // loop_header_branch
      %26 = sbr.rel (%p24) target = $region8
    $region5: #{tpu_custom_call.1} parent=1 // loop_body
      %s28 = ssub.s32 %s23, 1
      %s29 = ssub.s32 %s23, 2
      %s30 = sadd.s32 %s23, 1
      %s31 = ssub.s32 %s23, %s30
      %p32 = scmp.eq.s32.totalorder %s31, 0
      %s34 = sadd.s32 %s33, 1
      %s35 = scalar_select %p32, %s33, %s34
      %p38 = pneg %p32
      %p39 = scmp.eq.s32.totalorder %s23, 1
      %p40 = por %p38, %p39
      %p41 = scmp.ne.s32.totalorder %s33, %s36
      %p42 = scmp.eq.s32.totalorder %s23, 0
      %p43 = por %p41, %p42
      %p44 = scmp.ne.s32.totalorder %s33, %s36
      %p45 = scmp.eq.s32.totalorder %s28, 1
      %p46 = por %p44, %p45
      %p47 = scmp.ne.s32.totalorder %s36, %s37
      %p48 = scmp.eq.s32.totalorder %s28, 0
      %p49 = por %p47, %p48
      %p50 = scmp.ne.s32.totalorder %s36, %s37
      %p51 = scmp.eq.s32.totalorder %s29, 1
      %p52 = por %p50, %p51
      %p54 = scmp.ne.s32.totalorder %s37, %s53
      %p55 = scmp.eq.s32.totalorder %s29, 0
      %p56 = por %p54, %p55
      %s57 = ssub.s32 %s23, %s30
      %p58 = scmp.eq.s32.totalorder %s57, 0
      %s60 = sadd.s32 %s59, 1
      %s61 = scalar_select %p58, %s59, %s60
      %p64 = pneg %p58
      %p65 = scmp.eq.s32.totalorder %s23, 1
      %p66 = por %p64, %p65
      %p67 = scmp.ne.s32.totalorder %s59, %s62
      %p68 = scmp.eq.s32.totalorder %s23, 0
      %p69 = por %p67, %p68
      %p70 = scmp.ne.s32.totalorder %s59, %s62
      %p71 = scmp.eq.s32.totalorder %s28, 1
      %p72 = por %p70, %p71
      %p73 = scmp.ne.s32.totalorder %s62, %s63
      %p74 = scmp.eq.s32.totalorder %s28, 0
      %p75 = por %p73, %p74
      %p76 = scmp.ne.s32.totalorder %s62, %s63
      %p77 = scmp.eq.s32.totalorder %s29, 1
      %p78 = por %p76, %p77
      %p80 = scmp.ne.s32.totalorder %s63, %s79
      %p81 = scmp.eq.s32.totalorder %s29, 0
      %p82 = por %p80, %p81
      %s84 = sadd.s32 %s83, 1
      %p87 = scmp.eq.s32.totalorder %s23, 1
      %p88 = scmp.ne.s32.totalorder %s83, %s85
      %p89 = scmp.eq.s32.totalorder %s23, 0
      %p90 = por %p88, %p89
      %p91 = scmp.ne.s32.totalorder %s83, %s85
      %p92 = scmp.eq.s32.totalorder %s28, 1
      %p93 = por %p91, %p92
      %p94 = scmp.ne.s32.totalorder %s85, %s86
      %p95 = scmp.eq.s32.totalorder %s28, 0
      %p96 = por %p94, %p95
      %p97 = scmp.ne.s32.totalorder %s85, %s86
      %p98 = scmp.eq.s32.totalorder %s29, 1
      %p99 = por %p97, %p98
      %p101 = scmp.ne.s32.totalorder %s86, %s100
      %p102 = scmp.eq.s32.totalorder %s29, 0
      %p103 = por %p101, %p102
      %s105 = sadd.s32 %s104, 1
      %p108 = scmp.eq.s32.totalorder %s23, 1
      %p109 = scmp.ne.s32.totalorder %s104, %s106
      %p110 = scmp.eq.s32.totalorder %s23, 0
      %p111 = por %p109, %p110
      %p112 = scmp.ne.s32.totalorder %s104, %s106
      %p113 = scmp.eq.s32.totalorder %s28, 1
      %p114 = por %p112, %p113
      %p115 = scmp.ne.s32.totalorder %s106, %s107
      %p116 = scmp.eq.s32.totalorder %s28, 0
      %p117 = por %p115, %p116
      %p118 = scmp.ne.s32.totalorder %s106, %s107
      %p119 = scmp.eq.s32.totalorder %s29, 1
      %p120 = por %p118, %p119
      %p122 = scmp.ne.s32.totalorder %s107, %s121
      %p123 = scmp.eq.s32.totalorder %s29, 0
      %p124 = por %p122, %p123
      %s126 = sadd.s32 %s125, 1
      %p129 = scmp.eq.s32.totalorder %s23, 1
      %p130 = scmp.ne.s32.totalorder %s125, %s127
      %p131 = scmp.eq.s32.totalorder %s23, 0
      %p132 = por %p130, %p131
      %p133 = scmp.ne.s32.totalorder %s125, %s127
      %p134 = scmp.eq.s32.totalorder %s28, 1
      %p135 = por %p133, %p134
      %p136 = scmp.ne.s32.totalorder %s127, %s128
      %p137 = scmp.eq.s32.totalorder %s28, 0
      %p138 = por %p136, %p137
      %p139 = scmp.ne.s32.totalorder %s127, %s128
      %p140 = scmp.eq.s32.totalorder %s29, 1
      %p141 = por %p139, %p140
      %p143 = scmp.ne.s32.totalorder %s128, %s142
      %p144 = scmp.eq.s32.totalorder %s29, 0
      %p145 = por %p143, %p144
      %s147 = sadd.s32 %s146, 1
      %p150 = scmp.eq.s32.totalorder %s23, 1
      %p151 = scmp.ne.s32.totalorder %s146, %s148
      %p152 = scmp.eq.s32.totalorder %s23, 0
      %p153 = por %p151, %p152
      %p154 = scmp.ne.s32.totalorder %s146, %s148
      %p155 = scmp.eq.s32.totalorder %s28, 1
      %p156 = por %p154, %p155
      %p157 = scmp.ne.s32.totalorder %s148, %s149
      %p158 = scmp.eq.s32.totalorder %s28, 0
      %p159 = por %p157, %p158
      %p160 = scmp.ne.s32.totalorder %s148, %s149
      %p161 = scmp.eq.s32.totalorder %s29, 1
      %p162 = por %p160, %p161
      %p164 = scmp.ne.s32.totalorder %s149, %s163
      %p165 = scmp.eq.s32.totalorder %s29, 0
      %p166 = por %p164, %p165
      %s168 = sadd.s32 %s167, 1
      %p171 = scmp.eq.s32.totalorder %s23, 1
      %p172 = scmp.ne.s32.totalorder %s167, %s169
      %p173 = scmp.eq.s32.totalorder %s23, 0
      %p174 = por %p172, %p173
      %p175 = scmp.ne.s32.totalorder %s167, %s169
      %p176 = scmp.eq.s32.totalorder %s28, 1
      %p177 = por %p175, %p176
      %p178 = scmp.ne.s32.totalorder %s169, %s170
      %p179 = scmp.eq.s32.totalorder %s28, 0
      %p180 = por %p178, %p179
      %p181 = scmp.ne.s32.totalorder %s169, %s170
      %p182 = scmp.eq.s32.totalorder %s29, 1
      %p183 = por %p181, %p182
      %p185 = scmp.ne.s32.totalorder %s170, %s184
      %p186 = scmp.eq.s32.totalorder %s29, 0
      %p187 = por %p185, %p186
      %s189 = sadd.s32 %s188, 1
      %p192 = scmp.eq.s32.totalorder %s23, 1
      %p193 = scmp.ne.s32.totalorder %s188, %s190
      %p194 = scmp.eq.s32.totalorder %s23, 0
      %p195 = por %p193, %p194
      %p196 = scmp.ne.s32.totalorder %s188, %s190
      %p197 = scmp.eq.s32.totalorder %s28, 1
      %p198 = por %p196, %p197
      %p199 = scmp.ne.s32.totalorder %s190, %s191
      %p200 = scmp.eq.s32.totalorder %s28, 0
      %p201 = por %p199, %p200
      %p202 = scmp.ne.s32.totalorder %s190, %s191
      %p203 = scmp.eq.s32.totalorder %s29, 1
      %p204 = por %p202, %p203
      %p206 = scmp.ne.s32.totalorder %s191, %s205
      %p207 = scmp.eq.s32.totalorder %s29, 0
      %p208 = por %p206, %p207
      %s210 = sadd.s32 %s209, 1
      %p213 = scmp.eq.s32.totalorder %s23, 1
      %p214 = scmp.ne.s32.totalorder %s209, %s211
      %p215 = scmp.eq.s32.totalorder %s23, 0
      %p216 = por %p214, %p215
      %p217 = scmp.ne.s32.totalorder %s209, %s211
      %p218 = scmp.eq.s32.totalorder %s28, 1
      %p219 = por %p217, %p218
      %p220 = scmp.ne.s32.totalorder %s211, %s212
      %p221 = scmp.eq.s32.totalorder %s28, 0
      %p222 = por %p220, %p221
      %p223 = scmp.ne.s32.totalorder %s211, %s212
      %p224 = scmp.eq.s32.totalorder %s29, 1
      %p225 = por %p223, %p224
      %p227 = scmp.ne.s32.totalorder %s212, %s226
      %p228 = scmp.eq.s32.totalorder %s29, 0
      %p229 = por %p227, %p228
      %s231 = sadd.s32 %s230, 1
      %p234 = scmp.eq.s32.totalorder %s23, 1
      %p235 = scmp.ne.s32.totalorder %s230, %s232
      %p236 = scmp.eq.s32.totalorder %s23, 0
      %p237 = por %p235, %p236
      %p238 = scmp.ne.s32.totalorder %s230, %s232
      %p239 = scmp.eq.s32.totalorder %s28, 1
      %p240 = por %p238, %p239
      %p241 = scmp.ne.s32.totalorder %s232, %s233
      %p242 = scmp.eq.s32.totalorder %s28, 0
      %p243 = por %p241, %p242
      %p244 = scmp.ne.s32.totalorder %s232, %s233
      %p245 = scmp.eq.s32.totalorder %s29, 1
      %p246 = por %p244, %p245
      %p248 = scmp.ne.s32.totalorder %s233, %s247
      %p249 = scmp.eq.s32.totalorder %s29, 0
      %p250 = por %p248, %p249
      %s251 = ssub.s32 %s23, %s30
      %p252 = scmp.eq.s32.totalorder %s251, 0
      %s254 = sadd.s32 %s253, 1
      %s255 = scalar_select %p252, %s253, %s254
      %p258 = pneg %p252
      %p259 = scmp.eq.s32.totalorder %s23, 1
      %p260 = por %p258, %p259
      %p261 = scmp.ne.s32.totalorder %s253, %s256
      %p262 = scmp.eq.s32.totalorder %s23, 0
      %p263 = por %p261, %p262
      %p264 = scmp.ne.s32.totalorder %s253, %s256
      %p265 = scmp.eq.s32.totalorder %s28, 1
      %p266 = por %p264, %p265
      %p267 = scmp.ne.s32.totalorder %s256, %s257
      %p268 = scmp.eq.s32.totalorder %s28, 0
      %p269 = por %p267, %p268
      %p270 = scmp.ne.s32.totalorder %s256, %s257
      %p271 = scmp.eq.s32.totalorder %s29, 1
      %p272 = por %p270, %p271
      %p274 = scmp.ne.s32.totalorder %s257, %s273
      %p275 = scmp.eq.s32.totalorder %s29, 0
      %p276 = por %p274, %p275
      %p277 = scmp.le.s32.totalorder 1, %s23
      %p278 = scmp.lt.s32.totalorder %s23, 3
      %p279 = pnand %p277, %p278
      %p280 = pneg %p279
      // Predicated region
      $region9: #{tpu_custom_call.1} parent=5 // pred_check
        _
      $region10: #{tpu_custom_call.1} parent=5 // pred_check_branch
        %282 = sbr.rel (%p279) target = $region12
      $region11: #{tpu_custom_call.1} parent=5 // pred_region
        %s283 = ssub.s32 %s23, 1
        // Predicated region
        $region13: #{tpu_custom_call.1} parent=11 // pred_check
          %p284 = pneg %p96
        $region14: #{tpu_custom_call.1} parent=11 // pred_check_branch
          %286 = sbr.rel (%p284) target = $region16
        $region15: #{tpu_custom_call.1} parent=11 // pred_region
          _
        $region16: #{tpu_custom_call.1} parent=11 // pred_fallthru
          _
        // Predicated region
        $region17: #{tpu_custom_call.1} parent=11 // pred_check
          %p287 = pneg %p117
        $region18: #{tpu_custom_call.1} parent=11 // pred_check_branch
          %289 = sbr.rel (%p287) target = $region20
        $region19: #{tpu_custom_call.1} parent=11 // pred_region
          _
        $region20: #{tpu_custom_call.1} parent=11 // pred_fallthru
          _
        // Predicated region
        $region21: #{tpu_custom_call.1} parent=11 // pred_check
          %p290 = pneg %p138
        $region22: #{tpu_custom_call.1} parent=11 // pred_check_branch
          %292 = sbr.rel (%p290) target = $region24
        $region23: #{tpu_custom_call.1} parent=11 // pred_region
          _
        $region24: #{tpu_custom_call.1} parent=11 // pred_fallthru
          _
        // Predicated region
        $region25: #{tpu_custom_call.1} parent=11 // pred_check
          %p293 = pneg %p159
        $region26: #{tpu_custom_call.1} parent=11 // pred_check_branch
          %295 = sbr.rel (%p293) target = $region28
        $region27: #{tpu_custom_call.1} parent=11 // pred_region
          _
        $region28: #{tpu_custom_call.1} parent=11 // pred_fallthru
          _
        // Predicated region
        $region29: #{tpu_custom_call.1} parent=11 // pred_check
          %p296 = pneg %p180
        $region30: #{tpu_custom_call.1} parent=11 // pred_check_branch
          %298 = sbr.rel (%p296) target = $region32
        $region31: #{tpu_custom_call.1} parent=11 // pred_region
          %s300 = ssub.s32 1024, 1024
          %301 = vsyncadd [#allocation6], %s300
          %s302 = sshll.u32 [#allocation5], 4
          %s303 = int_to_ptr.vmem [resolvable:$true] %s302
          %308 = dma.hbm_to_vmem [thread:$0]  %s6, 1024, %s303, [#allocation6], 64, 64, 4
        $region32: #{tpu_custom_call.1} parent=11 // pred_fallthru
          _
        // Predicated region
        $region33: #{tpu_custom_call.1} parent=11 // pred_check
          %p309 = pneg %p201
        $region34: #{tpu_custom_call.1} parent=11 // pred_check_branch
          %311 = sbr.rel (%p309) target = $region36
        $region35: #{tpu_custom_call.1} parent=11 // pred_region
          _
        $region36: #{tpu_custom_call.1} parent=11 // pred_fallthru
          _
        // Predicated region
        $region37: #{tpu_custom_call.1} parent=11 // pred_check
          %p312 = pneg %p222
        $region38: #{tpu_custom_call.1} parent=11 // pred_check_branch
          %314 = sbr.rel (%p312) target = $region40
        $region39: #{tpu_custom_call.1} parent=11 // pred_region
          %s316 = ssub.s32 1024, 1024
          %317 = vsyncadd [#allocation6], %s316
          %s318 = sshll.u32 [#allocation7], 4
          %s319 = int_to_ptr.vmem [resolvable:$true] %s318
          %324 = dma.hbm_to_vmem [thread:$0]  %s8, 1024, %s319, [#allocation6], 64, 64, 4
        $region40: #{tpu_custom_call.1} parent=11 // pred_fallthru
          _
        // Predicated region
        $region41: #{tpu_custom_call.1} parent=11 // pred_check
          %p325 = pneg %p243
        $region42: #{tpu_custom_call.1} parent=11 // pred_check_branch
          %327 = sbr.rel (%p325) target = $region44
        $region43: #{tpu_custom_call.1} parent=11 // pred_region
          _
        $region44: #{tpu_custom_call.1} parent=11 // pred_fallthru
          _
      $region12: #{tpu_custom_call.1} parent=5 // pred_fallthru
        _
      %p328 = scmp.lt.s32.totalorder %s23, 2
      // Predicated region
      $region45: #{tpu_custom_call.1} parent=5 // pred_check
        %p329 = pneg %p328
      $region46: #{tpu_custom_call.1} parent=5 // pred_check_branch
        %331 = sbr.rel (%p329) target = $region48
      $region47: #{tpu_custom_call.1} parent=5 // pred_region
        // Predicated region
        $region49: #{tpu_custom_call.1} parent=47 // pred_check
          %p332 = pneg %p43
        $region50: #{tpu_custom_call.1} parent=47 // pred_check_branch
          %334 = sbr.rel (%p332) target = $region52
        $region51: #{tpu_custom_call.1} parent=47 // pred_region
          %s335 = sand.u32 %s33, 1
          %s336 = scalar_lea.sflag [#allocation3], %s335
          %s337 = sand.u32 %s33, 1
          %s338 = smul.addr %s337, 16
          %s339 = scalar_lea.vmem [#allocation2], %s338
          %s341 = ssub.s32 256, 256
          %342 = vsyncadd %s336, %s341
          %s343 = smul.addr %s23, 2
          %s344 = smul.addr %s343, 128
          %s345 = scalar_lea.hbm %s0, %s344
          %s347 = sshll.u32 %s339, 4
          %s348 = int_to_ptr.vmem [resolvable:$true] %s347
          %350 = dma.hbm_to_vmem [thread:$0]  %s345, 256, %s348, %s336
        $region52: #{tpu_custom_call.1} parent=47 // pred_fallthru
          _
        // Predicated region
        $region53: #{tpu_custom_call.1} parent=47 // pred_check
          %p351 = pneg %p69
        $region54: #{tpu_custom_call.1} parent=47 // pred_check_branch
          %353 = sbr.rel (%p351) target = $region56
        $region55: #{tpu_custom_call.1} parent=47 // pred_region
          %p354 = scmp.lt.s32.totalorder %s23, 1
          %s355 = scalar_select %p354, %s23, 1
          %s356 = smul.addr %s355, 8
          %s357 = scalar_lea.vmem %s1, %s356
        $region56: #{tpu_custom_call.1} parent=47 // pred_fallthru
          _
      $region48: #{tpu_custom_call.1} parent=5 // pred_fallthru
        _
      %p358 = scmp.le.s32.totalorder 1, %s23
      %p359 = scmp.lt.s32.totalorder %s23, 3
      %p360 = pnand %p358, %p359
      %p361 = pneg %p360
      // Predicated region
      $region57: #{tpu_custom_call.1} parent=5 // pred_check
        _
      $region58: #{tpu_custom_call.1} parent=5 // pred_check_branch
        %363 = sbr.rel (%p360) target = $region60
      $region59: #{tpu_custom_call.1} parent=5 // pred_region
        %s364 = ssub.s32 %s23, 1
        %s365 = sand.u32 %s36, 1
        %s366 = scalar_lea.sflag [#allocation3], %s365
        %s367 = sand.u32 %s36, 1
        %s368 = smul.addr %s367, 16
        %s369 = scalar_lea.vmem [#allocation2], %s368
        // Predicated region
        $region61: #{tpu_custom_call.1} parent=59 // pred_check
          %p370 = pneg %p49
        $region62: #{tpu_custom_call.1} parent=59 // pred_check_branch
          %372 = sbr.rel (%p370) target = $region64
        $region63: #{tpu_custom_call.1} parent=59 // pred_region
          %373 = dma.done %s366, 256
        $region64: #{tpu_custom_call.1} parent=59 // pred_fallthru
          _
        // Predicated region
        $region65: #{tpu_custom_call.1} parent=59 // pred_check
          %p374 = pneg %p180
        $region66: #{tpu_custom_call.1} parent=59 // pred_check_branch
          %376 = sbr.rel (%p374) target = $region68
        $region67: #{tpu_custom_call.1} parent=59 // pred_region
          %377 = dma.done [#allocation6], 1024
        $region68: #{tpu_custom_call.1} parent=59 // pred_fallthru
          _
        // Predicated region
        $region69: #{tpu_custom_call.1} parent=59 // pred_check
          %p378 = pneg %p222
        $region70: #{tpu_custom_call.1} parent=59 // pred_check_branch
          %380 = sbr.rel (%p378) target = $region72
        $region71: #{tpu_custom_call.1} parent=59 // pred_region
          %381 = dma.done [#allocation6], 1024
        $region72: #{tpu_custom_call.1} parent=59 // pred_fallthru
          _
        %s382 = sand.u32 %s36, 1
        %s383 = scalar_lea.sflag [#allocation3], %s382
        %s384 = sand.u32 %s36, 1
        %s385 = smul.addr %s384, 16
        %s386 = scalar_lea.vmem [#allocation2], %s385
        %p387 = pneg %p49
        %p388 = pneg %p46
        %p389 = scmp.lt.s32.totalorder %s28, 1
        %s390 = scalar_select %p389, %s28, 1
        %s391 = smul.addr %s390, 8
        %s392 = scalar_lea.vmem %s1, %s391
        %p393 = pneg %p75
        %p394 = pneg %p72
        %p395 = pneg %p96
        %p396 = pneg %p93
        %p397 = pneg %p117
        %p398 = pneg %p114
        %p399 = pneg %p138
        %p400 = pneg %p135
        %p401 = pneg %p159
        %p402 = pneg %p156
        %p403 = pneg %p180
        %p404 = pneg %p177
        %p405 = pneg %p201
        %p406 = pneg %p198
        %p407 = pneg %p222
        %p408 = pneg %p219
        %p409 = pneg %p243
        %p410 = pneg %p240
        %p411 = pneg %p269
        %p412 = pneg %p266
        %s413 = sand.u32 %s256, 1
        %s414 = scalar_lea.sflag [#allocation4], %s413
        %s415 = sand.u32 %s256, 1
        %s416 = smul.addr %s415, 8
        %s417 = scalar_lea.vmem [#allocation8], %s416
        %p418 = scmp.lt.s32.totalorder %s28, 1
        %s419 = scalar_select %p418, %s28, 1
        %s420 = smul.addr %s419, 8
        %s421 = scalar_lea.vmem %s1, %s420
        %v423 = vld [vmem:[%s369] sm:$0xff]
        %v424 = vld [vmem:[%s421] sm:$0xff]
        %426 = vset.pattern.permute.xlu0 0
        %427 = vperm.xlu0 %426, %v424
        %v428 = vpop.permute.xlu0 %427
        %v430 = vmul.f32 %v423, %v428
        %v431 = vld [vmem:[%s2] sm:$0x1]
        %v432 = vlaneseq
        %v433 = vshrl.u32 %v432, 7
        %v434 = vsub.s32 0, %v433
        %v435 = vrot.slane %v431, %v434
        %v436 = vmul.f32 %v430, %v435
        %v437 = vld [vmem:[%s369 + $0x8] sm:$0xff]
        %438 = vset.pattern.permute.xlu0 1
        %439 = vperm.xlu0 %438, %v424
        %v440 = vpop.permute.xlu0 %439
        %v442 = vmul.f32 %v437, %v440
        %v443 = vld [vmem:[%s2 + $0x1] sm:$0x1]
        %v444 = vlaneseq
        %v445 = vshrl.u32 %v444, 7
        %v446 = vsub.s32 0, %v445
        %v447 = vrot.slane %v443, %v446
        %v448 = vmul.f32 %v442, %v447
        %v449 = vadd.f32 %v436, %v448
        %v450 = vld [vmem:[%s3] sm:$0x1]
        %v452 = vlaneseq
        %v453 = vshrl.u32 %v452, 7
        %v454 = vsub.s32 0, %v453
        %v455 = vrot.slane %v450, %v454
        %v457 = vadd.f32 %v449, %v455
        %458 = vadd.xlane.f32.xlu0 %v457
        %v459 = vpop.xlane.xlu0 %458
        %v460 = vmul.f32 %v457, %v457
        %461 = vadd.xlane.f32.xlu0 %v460
        %v462 = vpop.xlane.xlu0 %461
        %v463 = vmul.f32 %v459, 0.03125
        %v464 = vmul.f32 %v462, 0.03125
        %v465 = vmul.f32 %v463, %v463
        %v466 = vsub.f32 %v464, %v465
        %v467 = vsub.f32 %v457, %v463
        %v468 = vadd.f32 %v466, 1e-05
        %v469 = vrsqrt.pop %v468
        %v470 = vmul.f32 %v467, %v469
        %v471 = vld [vmem:[%s4] sm:$0x1]
        %v473 = vlaneseq
        %v474 = vshrl.u32 %v473, 7
        %v475 = vsub.s32 0, %v474
        %v476 = vrot.slane %v471, %v475
        %v478 = vmul.f32 %v470, %v476
        %v479 = vld [vmem:[%s5] sm:$0x1]
        %v481 = vlaneseq
        %v482 = vshrl.u32 %v481, 7
        %v483 = vsub.s32 0, %v482
        %v484 = vrot.slane %v479, %v483
        %v486 = vadd.f32 %v478, %v484
        %v487 = vpack.c.bf16 %v486, %v486
        %v488 = vld [vmem:[#allocation5] sm:$0xf]
        %v489 = vld [vmem:[#allocation5 + $0x4] sm:$0xf]
        %v490 = vld [vmem:[#allocation5 + $0x8] sm:$0xf]
        %v491 = vld [vmem:[#allocation5 + $0xc] sm:$0xf]
        %v492 = vld [vmem:[#allocation5 + $0x10] sm:$0xf]
        %v493 = vld [vmem:[#allocation5 + $0x14] sm:$0xf]
        %v494 = vld [vmem:[#allocation5 + $0x18] sm:$0xf]
        %v495 = vld [vmem:[#allocation5 + $0x1c] sm:$0xf]
        %v496 = vld [vmem:[#allocation5 + $0x20] sm:$0xf]
        %v497 = vld [vmem:[#allocation5 + $0x24] sm:$0xf]
        %v498 = vld [vmem:[#allocation5 + $0x28] sm:$0xf]
        %v499 = vld [vmem:[#allocation5 + $0x2c] sm:$0xf]
        %v500 = vld [vmem:[#allocation5 + $0x30] sm:$0xf]
        %v501 = vld [vmem:[#allocation5 + $0x34] sm:$0xf]
        %v502 = vld [vmem:[#allocation5 + $0x38] sm:$0xf]
        %v503 = vld [vmem:[#allocation5 + $0x3c] sm:$0xf]
        %v504 = vld [vmem:[%s7] sm:$0x1]
        %v506 = vlaneseq
        %v507 = vshrl.u32 %v506, 7
        %v508 = vsub.s32 0, %v507
        %v509 = vrot.slane %v504, %v508
        %v527 = vunpack.c.l.b16 %v488
        %v528 = vunpack.c.l.b16 %v489
        %v529 = vunpack.c.l.b16 %v490
        %v530 = vunpack.c.l.b16 %v491
        %v531 = vunpack.c.l.b16 %v492
        %v532 = vunpack.c.l.b16 %v493
        %v533 = vunpack.c.l.b16 %v494
        %v534 = vunpack.c.l.b16 %v495
        %v535 = vunpack.c.l.b16 %v496
        %v536 = vunpack.c.l.b16 %v497
        %v537 = vunpack.c.l.b16 %v498
        %v538 = vunpack.c.l.b16 %v499
        %v539 = vunpack.c.l.b16 %v500
        %v540 = vunpack.c.l.b16 %v501
        %v541 = vunpack.c.l.b16 %v502
        %v542 = vunpack.c.l.b16 %v503
        %v543 = vpack.c.b16 %v528, %v527
        %v544 = vpack.c.b16 %v530, %v529
        %v545 = vpack.c.b16 %v532, %v531
        %v546 = vpack.c.b16 %v534, %v533
        %v547 = vpack.c.b16 %v536, %v535
        %v548 = vpack.c.b16 %v538, %v537
        %v549 = vpack.c.b16 %v540, %v539
        %v550 = vpack.c.b16 %v542, %v541
        %559 = vmatprep.subr.bf16.mxu0 0
        %560 = vmatpush1.bf16.msra.mxu0 %v550
        %561 = vmatprep.subr.bf16.mxu0 0
        %562 = vmatpush1.bf16.msra.mxu0 %v549
        %563 = vmatprep.subr.bf16.mxu0 0
        %564 = vmatpush1.bf16.msra.mxu0 %v548
        %565 = vmatprep.subr.bf16.mxu0 0
        %566 = vmatpush1.bf16.msra.mxu0 %v547
        %567 = vmatprep.subr.bf16.mxu0 0
        %568 = vmatpush1.bf16.msra.mxu0 %v546
        %569 = vmatprep.subr.bf16.mxu0 0
        %570 = vmatpush1.bf16.msra.mxu0 %v545
        %571 = vmatprep.subr.bf16.mxu0 0
        %572 = vmatpush1.bf16.msra.mxu0 %v544
        %573 = vmatprep.subr.bf16.mxu0 0
        %574 = vmatpush1.bf16.msra.mxu0 %v543
        %575 = vmatprep.subr.bf16.mxu0 0
        %576 = vmatpush2.bf16.msra.mxu0 0
        %577 = vmatprep.subr.bf16.mxu0 0
        %578 = vmatpush2.bf16.msra.mxu0 0
        %579 = vmatprep.subr.bf16.mxu0 0
        %580 = vmatpush2.bf16.msra.mxu0 0
        %581 = vmatprep.subr.bf16.mxu0 0
        %582 = vmatpush2.bf16.msra.mxu0 0
        %583 = vmatprep.subr.bf16.mxu0 0
        %584 = vmatpush2.bf16.msra.mxu0 0
        %585 = vmatprep.subr.bf16.mxu0 0
        %586 = vmatpush2.bf16.msra.mxu0 0
        %587 = vmatprep.subr.bf16.mxu0 0
        %588 = vmatpush2.bf16.msra.mxu0 0
        %589 = vmatprep.subr.bf16.mxu0 0
        %590 = vmatpush2.bf16.msra.mxu0 0
        %591 = vmatprep.mubr.bf16.mxu0 0
        %592 = vmatmul.mubr.bf16.gmra.mxu0 %v487
        %v593 = vpop.f32.mrf.mxu0
        %v594 = vadd.f32 %v509, %v593
        %v595 = vpop.f32.mrf.mxu0
        %v596 = vpop.f32.mrf.mxu0
        %v597 = vpop.f32.mrf.mxu0
        %598 = vdwg.mxu0
        %v599 = vmul.f32 %v594, %v594
        %v600 = vmul.f32 %v594, %v599
        %v601 = vmul.f32 %v600, 0.044715
        %v602 = vadd.f32 %v594, %v601
        %v603 = vmul.f32 %v602, 0.7978846
        %v604 = vtanh.pop %v603
        %v605 = vadd.f32 %v604, 1.0
        %v606 = vmul.f32 %v605, 0.5
        %v607 = vmul.f32 %v594, %v606
        %v608 = vpack.c.bf16 %v607, %v607
        %v609 = vld [vmem:[#allocation7] sm:$0xf]
        %v610 = vld [vmem:[#allocation7 + $0x4] sm:$0xf]
        %v611 = vld [vmem:[#allocation7 + $0x8] sm:$0xf]
        %v612 = vld [vmem:[#allocation7 + $0xc] sm:$0xf]
        %v613 = vld [vmem:[#allocation7 + $0x10] sm:$0xf]
        %v614 = vld [vmem:[#allocation7 + $0x14] sm:$0xf]
        %v615 = vld [vmem:[#allocation7 + $0x18] sm:$0xf]
        %v616 = vld [vmem:[#allocation7 + $0x1c] sm:$0xf]
        %v617 = vld [vmem:[#allocation7 + $0x20] sm:$0xf]
        %v618 = vld [vmem:[#allocation7 + $0x24] sm:$0xf]
        %v619 = vld [vmem:[#allocation7 + $0x28] sm:$0xf]
        %v620 = vld [vmem:[#allocation7 + $0x2c] sm:$0xf]
        %v621 = vld [vmem:[#allocation7 + $0x30] sm:$0xf]
        %v622 = vld [vmem:[#allocation7 + $0x34] sm:$0xf]
        %v623 = vld [vmem:[#allocation7 + $0x38] sm:$0xf]
        %v624 = vld [vmem:[#allocation7 + $0x3c] sm:$0xf]
        %v625 = vld [vmem:[%s9] sm:$0x1]
        %v627 = vlaneseq
        %v628 = vshrl.u32 %v627, 7
        %v629 = vsub.s32 0, %v628
        %v630 = vrot.slane %v625, %v629
        %v648 = vunpack.c.l.b16 %v609
        %v649 = vunpack.c.l.b16 %v610
        %v650 = vunpack.c.l.b16 %v611
        %v651 = vunpack.c.l.b16 %v612
        %v652 = vunpack.c.l.b16 %v613
        %v653 = vunpack.c.l.b16 %v614
        %v654 = vunpack.c.l.b16 %v615
        %v655 = vunpack.c.l.b16 %v616
        %v656 = vunpack.c.l.b16 %v617
        %v657 = vunpack.c.l.b16 %v618
        %v658 = vunpack.c.l.b16 %v619
        %v659 = vunpack.c.l.b16 %v620
        %v660 = vunpack.c.l.b16 %v621
        %v661 = vunpack.c.l.b16 %v622
        %v662 = vunpack.c.l.b16 %v623
        %v663 = vunpack.c.l.b16 %v624
        %v664 = vpack.c.b16 %v649, %v648
        %v665 = vpack.c.b16 %v651, %v650
        %v666 = vpack.c.b16 %v653, %v652
        %v667 = vpack.c.b16 %v655, %v654
        %v668 = vpack.c.b16 %v657, %v656
        %v669 = vpack.c.b16 %v659, %v658
        %v670 = vpack.c.b16 %v661, %v660
        %v671 = vpack.c.b16 %v663, %v662
        %680 = vmatprep.subr.bf16.mxu0 0
        %681 = vmatpush1.bf16.msra.mxu0 %v671
        %682 = vmatprep.subr.bf16.mxu0 0
        %683 = vmatpush1.bf16.msra.mxu0 %v670
        %684 = vmatprep.subr.bf16.mxu0 0
        %685 = vmatpush1.bf16.msra.mxu0 %v669
        %686 = vmatprep.subr.bf16.mxu0 0
        %687 = vmatpush1.bf16.msra.mxu0 %v668
        %688 = vmatprep.subr.bf16.mxu0 0
        %689 = vmatpush1.bf16.msra.mxu0 %v667
        %690 = vmatprep.subr.bf16.mxu0 0
        %691 = vmatpush1.bf16.msra.mxu0 %v666
        %692 = vmatprep.subr.bf16.mxu0 0
        %693 = vmatpush1.bf16.msra.mxu0 %v665
        %694 = vmatprep.subr.bf16.mxu0 0
        %695 = vmatpush1.bf16.msra.mxu0 %v664
        %696 = vmatprep.subr.bf16.mxu0 0
        %697 = vmatpush2.bf16.msra.mxu0 0
        %698 = vmatprep.subr.bf16.mxu0 0
        %699 = vmatpush2.bf16.msra.mxu0 0
        %700 = vmatprep.subr.bf16.mxu0 0
        %701 = vmatpush2.bf16.msra.mxu0 0
        %702 = vmatprep.subr.bf16.mxu0 0
        %703 = vmatpush2.bf16.msra.mxu0 0
        %704 = vmatprep.subr.bf16.mxu0 0
        %705 = vmatpush2.bf16.msra.mxu0 0
        %706 = vmatprep.subr.bf16.mxu0 0
        %707 = vmatpush2.bf16.msra.mxu0 0
        %708 = vmatprep.subr.bf16.mxu0 0
        %709 = vmatpush2.bf16.msra.mxu0 0
        %710 = vmatprep.subr.bf16.mxu0 0
        %711 = vmatpush2.bf16.msra.mxu0 0
        %712 = vmatprep.mubr.bf16.mxu0 0
        %713 = vmatmul.mubr.bf16.gmra.mxu0 %v608
        %v714 = vpop.f32.mrf.mxu0
        %v715 = vadd.f32 %v630, %v714
        %v716 = vpop.f32.mrf.mxu0
        %v717 = vpop.f32.mrf.mxu0
        %v718 = vpop.f32.mrf.mxu0
        %719 = vdwg.mxu0
        %720 = vst [vmem:[%s417] sm:$0xff] %v715
        %s721 = sand.u32 %s256, 1
        %s722 = scalar_lea.sflag [#allocation4], %s721
        %s723 = sand.u32 %s256, 1
        %s724 = smul.addr %s723, 8
        %s725 = scalar_lea.vmem [#allocation8], %s724
        // Predicated region
        $region73: #{tpu_custom_call.1} parent=59 // pred_check
          %p726 = pneg %p266
        $region74: #{tpu_custom_call.1} parent=59 // pred_check_branch
          %728 = sbr.rel (%p726) target = $region76
        $region75: #{tpu_custom_call.1} parent=59 // pred_region
          %s730 = ssub.s32 128, 128
          %731 = vsyncadd %s722, %s730
          %s732 = smul.addr %s28, 128
          %s733 = scalar_lea.hbm %s10, %s732
          %s735 = sshll.u32 %s725, 4
          %s736 = int_to_ptr.vmem [resolvable:$true] %s735
          %738 = dma.vmem_to_hbm [thread:$0]  %s736, 128, %s733, %s722
        $region76: #{tpu_custom_call.1} parent=59 // pred_fallthru
          _
      $region60: #{tpu_custom_call.1} parent=5 // pred_fallthru
        _
      %p739 = scmp.le.s32.totalorder 2, %s23
      // Predicated region
      $region77: #{tpu_custom_call.1} parent=5 // pred_check
        %p740 = pneg %p739
      $region78: #{tpu_custom_call.1} parent=5 // pred_check_branch
        %742 = sbr.rel (%p740) target = $region80
      $region79: #{tpu_custom_call.1} parent=5 // pred_region
        %s743 = ssub.s32 %s23, 2
        // Predicated region
        $region81: #{tpu_custom_call.1} parent=79 // pred_check
          %p744 = pneg %p272
        $region82: #{tpu_custom_call.1} parent=79 // pred_check_branch
          %746 = sbr.rel (%p744) target = $region84
        $region83: #{tpu_custom_call.1} parent=79 // pred_region
          %s747 = sand.u32 %s257, 1
          %s748 = scalar_lea.sflag [#allocation4], %s747
          %s749 = sand.u32 %s257, 1
          %s750 = smul.addr %s749, 8
          %s751 = scalar_lea.vmem [#allocation8], %s750
          %752 = dma.done %s748, 128
        $region84: #{tpu_custom_call.1} parent=79 // pred_fallthru
          _
      $region80: #{tpu_custom_call.1} parent=5 // pred_fallthru
        _
    $region6: #{tpu_custom_call.1} parent=1 // loop_footer
      %s27 = sadd.s32 1, %s23
    $region7: #{tpu_custom_call.1} parent=1 // loop_footer_branch
      %22 = sbr.rel target = $region3
    $region8: #{tpu_custom_call.1} parent=1 // loop_exit
      _
    %753 = vsyncpa [#allocation3], 1
    %s754 = scalar_lea.sflag [#allocation3], 1
    %755 = vsyncpa %s754, 1
    %756 = vsyncpa [#allocation6], 1
    %757 = vsyncpa [#allocation4], 1
    %s758 = scalar_lea.sflag [#allocation4], 1
    %759 = vsyncpa %s758, 1

// kernel: tpu_custom_call.1
$region0: #{tpu_custom_call.1}
  #allocation0 [shape = 'u32[]', space=smem, size = 0x4, offset = 0x4, fixed_abs, tag = 'smem constant byte address 0x4 - core index']
  #allocation1 [shape = 'u32[144,128]{1,0:T(1,128)}', space=vmem, size = 0x12000, scoped, tag = 'internal scratch']
  %s0 = inlined_call_operand.hbm [shape: f32[16,256], index: 0, kind: input, shape index: {}]
  %s1 = inlined_call_operand.vmem [shape: f32[16,2], index: 1, kind: input, shape index: {}]
  %s2 = inlined_call_operand.vmem [shape: f32[2,128], index: 2, kind: input, shape index: {}]
  %s3 = inlined_call_operand.vmem [shape: f32[1,128], index: 3, kind: input, shape index: {}]
  %s4 = inlined_call_operand.vmem [shape: f32[1,128], index: 4, kind: input, shape index: {}]
  %s5 = inlined_call_operand.vmem [shape: f32[1,128], index: 5, kind: input, shape index: {}]
  %s6 = inlined_call_operand.hbm [shape: bf16[128,128], index: 6, kind: input, shape index: {}]
  %s7 = inlined_call_operand.vmem [shape: f32[1,128], index: 7, kind: input, shape index: {}]
  %s8 = inlined_call_operand.hbm [shape: bf16[128,128], index: 8, kind: input, shape index: {}]
  %s9 = inlined_call_operand.vmem [shape: f32[1,128], index: 9, kind: input, shape index: {}]
  %s10 = inlined_call_operand.hbm [shape: f32[16,128], index: 10, kind: output, shape index: {}]
  %s11 = sld [smem:[#allocation0]]
  $region85: #{tpu_custom_call.1} parent=0
    _
  %s13 = ssub.s32 1, %s11
  %s14 = scalar_select 0, %s13, %s11
  $region1: #{tpu_custom_call.1} parent=0
    #allocation2 [shape = 'u8[16384]{0}', space=vmem, size = 0x4000, scoped, tag = 'input window, operand 0']
    #allocation3 [shape = 's32[2]{0}', space=sflag, size = 0x8, scoped, tag = 'scoped memory for tpu_custom_call.1']
    #allocation4 [shape = 's32[2]{0}', space=sflag, size = 0x8, scoped, tag = 'scoped memory for tpu_custom_call.1']
    #allocation5 [shape = 'u8[32768]{0}', space=vmem, size = 0x8000, scoped, tag = 'input window, operand 6, single buffered']
    #allocation6 [shape = 's32[1]{0}', space=sflag, size = 0x4, scoped, tag = 'scoped memory for tpu_custom_call.1']
    #allocation7 [shape = 'u8[32768]{0}', space=vmem, size = 0x8000, scoped, tag = 'input window, operand 8, single buffered']
    #allocation8 [shape = 'u8[8192]{0}', space=vmem, size = 0x2000, scoped, tag = 'output window, operand 0']
    %15 = vsyncpa [#allocation3], 0
    %s16 = scalar_lea.sflag [#allocation3], 1
    %17 = vsyncpa %s16, 0
    %18 = vsyncpa [#allocation6], 0
    %19 = vsyncpa [#allocation4], 0
    %s20 = scalar_lea.sflag [#allocation4], 1
    %21 = vsyncpa %s20, 0
    loop: start=0, step=1, limit=4
    $region2: #{tpu_custom_call.1} parent=1 // loop_pre_header
      _
    $region3: #{tpu_custom_call.1} parent=1 // loop_header
      %s23 = sphi 0, %s27
      %p24 = scmp.ge.s32.totalorder %s23, 4
      %s33 = sphi 0, %s35
      %s36 = sphi 0, %s33
      %s37 = sphi 0, %s36
      %s53 = sphi 0, %s37
      %s59 = sphi 0, %s61
      %s62 = sphi 0, %s59
      %s63 = sphi 0, %s62
      %s79 = sphi 0, %s63
      %s83 = sphi 0, %s83
      %s85 = sphi 0, %s83
      %s86 = sphi 0, %s85
      %s100 = sphi 0, %s86
      %s104 = sphi 0, %s104
      %s106 = sphi 0, %s104
      %s107 = sphi 0, %s106
      %s121 = sphi 0, %s107
      %s125 = sphi 0, %s125
      %s127 = sphi 0, %s125
      %s128 = sphi 0, %s127
      %s142 = sphi 0, %s128
      %s146 = sphi 0, %s146
      %s148 = sphi 0, %s146
      %s149 = sphi 0, %s148
      %s163 = sphi 0, %s149
      %s167 = sphi 0, %s167
      %s169 = sphi 0, %s167
      %s170 = sphi 0, %s169
      %s184 = sphi 0, %s170
      %s188 = sphi 0, %s188
      %s190 = sphi 0, %s188
      %s191 = sphi 0, %s190
      %s205 = sphi 0, %s191
      %s209 = sphi 0, %s209
      %s211 = sphi 0, %s209
      %s212 = sphi 0, %s211
      %s226 = sphi 0, %s212
      %s230 = sphi 0, %s230
      %s232 = sphi 0, %s230
      %s233 = sphi 0, %s232
      %s247 = sphi 0, %s233
      %s253 = sphi 0, %s255
      %s256 = sphi 0, %s253
      %s257 = sphi 0, %s256
      %s273 = sphi 0, %s257
    $region4: #{tpu_custom_call.1} parent=1 // loop_header_branch
      %26 = sbr.rel (%p24) target = $region8
    $region5: #{tpu_custom_call.1} parent=1 // loop_body
      %s28 = ssub.s32 %s23, 1
      %s29 = ssub.s32 %s23, 2
      %s30 = sadd.s32 %s23, 1
      %s31 = ssub.s32 %s23, %s30
      %p32 = scmp.eq.s32.totalorder %s31, 0
      %s34 = sadd.s32 %s33, 1
      %s35 = scalar_select %p32, %s33, %s34
      %p38 = pneg %p32
      %p39 = scmp.eq.s32.totalorder %s23, 1
      %p40 = por %p38, %p39
      %p41 = scmp.ne.s32.totalorder %s33, %s36
      %p42 = scmp.eq.s32.totalorder %s23, 0
      %p43 = por %p41, %p42
      %p44 = scmp.ne.s32.totalorder %s33, %s36
      %p45 = scmp.eq.s32.totalorder %s28, 1
      %p46 = por %p44, %p45
      %p47 = scmp.ne.s32.totalorder %s36, %s37
      %p48 = scmp.eq.s32.totalorder %s28, 0
      %p49 = por %p47, %p48
      %p50 = scmp.ne.s32.totalorder %s36, %s37
      %p51 = scmp.eq.s32.totalorder %s29, 1
      %p52 = por %p50, %p51
      %p54 = scmp.ne.s32.totalorder %s37, %s53
      %p55 = scmp.eq.s32.totalorder %s29, 0
      %p56 = por %p54, %p55
      %s57 = ssub.s32 %s23, %s30
      %p58 = scmp.eq.s32.totalorder %s57, 0
      %s60 = sadd.s32 %s59, 1
      %s61 = scalar_select %p58, %s59, %s60
      %p64 = pneg %p58
      %p65 = scmp.eq.s32.totalorder %s23, 1
      %p66 = por %p64, %p65
      %p67 = scmp.ne.s32.totalorder %s59, %s62
      %p68 = scmp.eq.s32.totalorder %s23, 0
      %p69 = por %p67, %p68
      %p70 = scmp.ne.s32.totalorder %s59, %s62
      %p71 = scmp.eq.s32.totalorder %s28, 1
      %p72 = por %p70, %p71
      %p73 = scmp.ne.s32.totalorder %s62, %s63
      %p74 = scmp.eq.s32.totalorder %s28, 0
      %p75 = por %p73, %p74
      %p76 = scmp.ne.s32.totalorder %s62, %s63
      %p77 = scmp.eq.s32.totalorder %s29, 1
      %p78 = por %p76, %p77
      %p80 = scmp.ne.s32.totalorder %s63, %s79
      %p81 = scmp.eq.s32.totalorder %s29, 0
      %p82 = por %p80, %p81
      %s84 = sadd.s32 %s83, 1
      %p87 = scmp.eq.s32.totalorder %s23, 1
      %p88 = scmp.ne.s32.totalorder %s83, %s85
      %p89 = scmp.eq.s32.totalorder %s23, 0
      %p90 = por %p88, %p89
      %p91 = scmp.ne.s32.totalorder %s83, %s85
      %p92 = scmp.eq.s32.totalorder %s28, 1
      %p93 = por %p91, %p92
      %p94 = scmp.ne.s32.totalorder %s85, %s86
      %p95 = scmp.eq.s32.totalorder %s28, 0
      %p96 = por %p94, %p95
      %p97 = scmp.ne.s32.totalorder %s85, %s86
      %p98 = scmp.eq.s32.totalorder %s29, 1
      %p99 = por %p97, %p98
      %p101 = scmp.ne.s32.totalorder %s86, %s100
      %p102 = scmp.eq.s32.totalorder %s29, 0
      %p103 = por %p101, %p102
      %s105 = sadd.s32 %s104, 1
      %p108 = scmp.eq.s32.totalorder %s23, 1
      %p109 = scmp.ne.s32.totalorder %s104, %s106
      %p110 = scmp.eq.s32.totalorder %s23, 0
      %p111 = por %p109, %p110
      %p112 = scmp.ne.s32.totalorder %s104, %s106
      %p113 = scmp.eq.s32.totalorder %s28, 1
      %p114 = por %p112, %p113
      %p115 = scmp.ne.s32.totalorder %s106, %s107
      %p116 = scmp.eq.s32.totalorder %s28, 0
      %p117 = por %p115, %p116
      %p118 = scmp.ne.s32.totalorder %s106, %s107
      %p119 = scmp.eq.s32.totalorder %s29, 1
      %p120 = por %p118, %p119
      %p122 = scmp.ne.s32.totalorder %s107, %s121
      %p123 = scmp.eq.s32.totalorder %s29, 0
      %p124 = por %p122, %p123
      %s126 = sadd.s32 %s125, 1
      %p129 = scmp.eq.s32.totalorder %s23, 1
      %p130 = scmp.ne.s32.totalorder %s125, %s127
      %p131 = scmp.eq.s32.totalorder %s23, 0
      %p132 = por %p130, %p131
      %p133 = scmp.ne.s32.totalorder %s125, %s127
      %p134 = scmp.eq.s32.totalorder %s28, 1
      %p135 = por %p133, %p134
      %p136 = scmp.ne.s32.totalorder %s127, %s128
      %p137 = scmp.eq.s32.totalorder %s28, 0
      %p138 = por %p136, %p137
      %p139 = scmp.ne.s32.totalorder %s127, %s128
      %p140 = scmp.eq.s32.totalorder %s29, 1
      %p141 = por %p139, %p140
      %p143 = scmp.ne.s32.totalorder %s128, %s142
      %p144 = scmp.eq.s32.totalorder %s29, 0
      %p145 = por %p143, %p144
      %s147 = sadd.s32 %s146, 1
      %p150 = scmp.eq.s32.totalorder %s23, 1
      %p151 = scmp.ne.s32.totalorder %s146, %s148
      %p152 = scmp.eq.s32.totalorder %s23, 0
      %p153 = por %p151, %p152
      %p154 = scmp.ne.s32.totalorder %s146, %s148
      %p155 = scmp.eq.s32.totalorder %s28, 1
      %p156 = por %p154, %p155
      %p157 = scmp.ne.s32.totalorder %s148, %s149
      %p158 = scmp.eq.s32.totalorder %s28, 0
      %p159 = por %p157, %p158
      %p160 = scmp.ne.s32.totalorder %s148, %s149
      %p161 = scmp.eq.s32.totalorder %s29, 1
      %p162 = por %p160, %p161
      %p164 = scmp.ne.s32.totalorder %s149, %s163
      %p165 = scmp.eq.s32.totalorder %s29, 0
      %p166 = por %p164, %p165
      %s168 = sadd.s32 %s167, 1
      %p171 = scmp.eq.s32.totalorder %s23, 1
      %p172 = scmp.ne.s32.totalorder %s167, %s169
      %p173 = scmp.eq.s32.totalorder %s23, 0
      %p174 = por %p172, %p173
      %p175 = scmp.ne.s32.totalorder %s167, %s169
      %p176 = scmp.eq.s32.totalorder %s28, 1
      %p177 = por %p175, %p176
      %p178 = scmp.ne.s32.totalorder %s169, %s170
      %p179 = scmp.eq.s32.totalorder %s28, 0
      %p180 = por %p178, %p179
      %p181 = scmp.ne.s32.totalorder %s169, %s170
      %p182 = scmp.eq.s32.totalorder %s29, 1
      %p183 = por %p181, %p182
      %p185 = scmp.ne.s32.totalorder %s170, %s184
      %p186 = scmp.eq.s32.totalorder %s29, 0
      %p187 = por %p185, %p186
      %s189 = sadd.s32 %s188, 1
      %p192 = scmp.eq.s32.totalorder %s23, 1
      %p193 = scmp.ne.s32.totalorder %s188, %s190
      %p194 = scmp.eq.s32.totalorder %s23, 0
      %p195 = por %p193, %p194
      %p196 = scmp.ne.s32.totalorder %s188, %s190
      %p197 = scmp.eq.s32.totalorder %s28, 1
      %p198 = por %p196, %p197
      %p199 = scmp.ne.s32.totalorder %s190, %s191
      %p200 = scmp.eq.s32.totalorder %s28, 0
      %p201 = por %p199, %p200
      %p202 = scmp.ne.s32.totalorder %s190, %s191
      %p203 = scmp.eq.s32.totalorder %s29, 1
      %p204 = por %p202, %p203
      %p206 = scmp.ne.s32.totalorder %s191, %s205
      %p207 = scmp.eq.s32.totalorder %s29, 0
      %p208 = por %p206, %p207
      %s210 = sadd.s32 %s209, 1
      %p213 = scmp.eq.s32.totalorder %s23, 1
      %p214 = scmp.ne.s32.totalorder %s209, %s211
      %p215 = scmp.eq.s32.totalorder %s23, 0
      %p216 = por %p214, %p215
      %p217 = scmp.ne.s32.totalorder %s209, %s211
      %p218 = scmp.eq.s32.totalorder %s28, 1
      %p219 = por %p217, %p218
      %p220 = scmp.ne.s32.totalorder %s211, %s212
      %p221 = scmp.eq.s32.totalorder %s28, 0
      %p222 = por %p220, %p221
      %p223 = scmp.ne.s32.totalorder %s211, %s212
      %p224 = scmp.eq.s32.totalorder %s29, 1
      %p225 = por %p223, %p224
      %p227 = scmp.ne.s32.totalorder %s212, %s226
      %p228 = scmp.eq.s32.totalorder %s29, 0
      %p229 = por %p227, %p228
      %s231 = sadd.s32 %s230, 1
      %p234 = scmp.eq.s32.totalorder %s23, 1
      %p235 = scmp.ne.s32.totalorder %s230, %s232
      %p236 = scmp.eq.s32.totalorder %s23, 0
      %p237 = por %p235, %p236
      %p238 = scmp.ne.s32.totalorder %s230, %s232
      %p239 = scmp.eq.s32.totalorder %s28, 1
      %p240 = por %p238, %p239
      %p241 = scmp.ne.s32.totalorder %s232, %s233
      %p242 = scmp.eq.s32.totalorder %s28, 0
      %p243 = por %p241, %p242
      %p244 = scmp.ne.s32.totalorder %s232, %s233
      %p245 = scmp.eq.s32.totalorder %s29, 1
      %p246 = por %p244, %p245
      %p248 = scmp.ne.s32.totalorder %s233, %s247
      %p249 = scmp.eq.s32.totalorder %s29, 0
      %p250 = por %p248, %p249
      %s251 = ssub.s32 %s23, %s30
      %p252 = scmp.eq.s32.totalorder %s251, 0
      %s254 = sadd.s32 %s253, 1
      %s255 = scalar_select %p252, %s253, %s254
      %p258 = pneg %p252
      %p259 = scmp.eq.s32.totalorder %s23, 1
      %p260 = por %p258, %p259
      %p261 = scmp.ne.s32.totalorder %s253, %s256
      %p262 = scmp.eq.s32.totalorder %s23, 0
      %p263 = por %p261, %p262
      %p264 = scmp.ne.s32.totalorder %s253, %s256
      %p265 = scmp.eq.s32.totalorder %s28, 1
      %p266 = por %p264, %p265
      %p267 = scmp.ne.s32.totalorder %s256, %s257
      %p268 = scmp.eq.s32.totalorder %s28, 0
      %p269 = por %p267, %p268
      %p270 = scmp.ne.s32.totalorder %s256, %s257
      %p271 = scmp.eq.s32.totalorder %s29, 1
      %p272 = por %p270, %p271
      %p274 = scmp.ne.s32.totalorder %s257, %s273
      %p275 = scmp.eq.s32.totalorder %s29, 0
      %p276 = por %p274, %p275
      %p277 = scmp.le.s32.totalorder 1, %s23
      %p278 = scmp.lt.s32.totalorder %s23, 3
      %p279 = pnand %p277, %p278
      %p280 = pneg %p279
      // Predicated region
      $region9: #{tpu_custom_call.1} parent=5 // pred_check
        _
      $region10: #{tpu_custom_call.1} parent=5 // pred_check_branch
        %282 = sbr.rel (%p279) target = $region12
      $region11: #{tpu_custom_call.1} parent=5 // pred_region
        %s283 = ssub.s32 %s23, 1
        // Predicated region
        $region13: #{tpu_custom_call.1} parent=11 // pred_check
          %p284 = pneg %p96
        $region14: #{tpu_custom_call.1} parent=11 // pred_check_branch
          %286 = sbr.rel (%p284) target = $region16
        $region15: #{tpu_custom_call.1} parent=11 // pred_region
          _
        $region16: #{tpu_custom_call.1} parent=11 // pred_fallthru
          _
        // Predicated region
        $region17: #{tpu_custom_call.1} parent=11 // pred_check
          %p287 = pneg %p117
        $region18: #{tpu_custom_call.1} parent=11 // pred_check_branch
          %289 = sbr.rel (%p287) target = $region20
        $region19: #{tpu_custom_call.1} parent=11 // pred_region
          _
        $region20: #{tpu_custom_call.1} parent=11 // pred_fallthru
          _
        // Predicated region
        $region21: #{tpu_custom_call.1} parent=11 // pred_check
          %p290 = pneg %p138
        $region22: #{tpu_custom_call.1} parent=11 // pred_check_branch
          %292 = sbr.rel (%p290) target = $region24
        $region23: #{tpu_custom_call.1} parent=11 // pred_region
          _
        $region24: #{tpu_custom_call.1} parent=11 // pred_fallthru
          _
        // Predicated region
        $region25: #{tpu_custom_call.1} parent=11 // pred_check
          %p293 = pneg %p159
        $region26: #{tpu_custom_call.1} parent=11 // pred_check_branch
          %295 = sbr.rel (%p293) target = $region28
        $region27: #{tpu_custom_call.1} parent=11 // pred_region
          _
        $region28: #{tpu_custom_call.1} parent=11 // pred_fallthru
          _
        // Predicated region
        $region29: #{tpu_custom_call.1} parent=11 // pred_check
          %p296 = pneg %p180
        $region30: #{tpu_custom_call.1} parent=11 // pred_check_branch
          %298 = sbr.rel (%p296) target = $region32
        $region31: #{tpu_custom_call.1} parent=11 // pred_region
          %s300 = ssub.s32 1024, 1024
          %301 = vsyncadd [#allocation6], %s300
          %s302 = sshll.u32 [#allocation5], 4
          %s303 = int_to_ptr.vmem [resolvable:$true] %s302
          %308 = dma.hbm_to_vmem [thread:$0]  %s6, 1024, %s303, [#allocation6], 64, 64, 4
        $region32: #{tpu_custom_call.1} parent=11 // pred_fallthru
          _
        // Predicated region
        $region33: #{tpu_custom_call.1} parent=11 // pred_check
          %p309 = pneg %p201
        $region34: #{tpu_custom_call.1} parent=11 // pred_check_branch
          %311 = sbr.rel (%p309) target = $region36
        $region35: #{tpu_custom_call.1} parent=11 // pred_region
          _
        $region36: #{tpu_custom_call.1} parent=11 // pred_fallthru
          _
        // Predicated region
        $region37: #{tpu_custom_call.1} parent=11 // pred_check
          %p312 = pneg %p222
        $region38: #{tpu_custom_call.1} parent=11 // pred_check_branch
          %314 = sbr.rel (%p312) target = $region40
        $region39: #{tpu_custom_call.1} parent=11 // pred_region
          %s316 = ssub.s32 1024, 1024
          %317 = vsyncadd [#allocation6], %s316
          %s318 = sshll.u32 [#allocation7], 4
          %s319 = int_to_ptr.vmem [resolvable:$true] %s318
          %324 = dma.hbm_to_vmem [thread:$0]  %s8, 1024, %s319, [#allocation6], 64, 64, 4
        $region40: #{tpu_custom_call.1} parent=11 // pred_fallthru
          _
        // Predicated region
        $region41: #{tpu_custom_call.1} parent=11 // pred_check
          %p325 = pneg %p243
        $region42: #{tpu_custom_call.1} parent=11 // pred_check_branch
          %327 = sbr.rel (%p325) target = $region44
        $region43: #{tpu_custom_call.1} parent=11 // pred_region
          _
        $region44: #{tpu_custom_call.1} parent=11 // pred_fallthru
          _
      $region12: #{tpu_custom_call.1} parent=5 // pred_fallthru
        _
      %p328 = scmp.lt.s32.totalorder %s23, 2
      // Predicated region
      $region45: #{tpu_custom_call.1} parent=5 // pred_check
        %p329 = pneg %p328
      $region46: #{tpu_custom_call.1} parent=5 // pred_check_branch
        %331 = sbr.rel (%p329) target = $region48
      $region47: #{tpu_custom_call.1} parent=5 // pred_region
        // Predicated region
        $region49: #{tpu_custom_call.1} parent=47 // pred_check
          %p332 = pneg %p43
        $region50: #{tpu_custom_call.1} parent=47 // pred_check_branch
          %334 = sbr.rel (%p332) target = $region52
        $region51: #{tpu_custom_call.1} parent=47 // pred_region
          %s335 = sand.u32 %s33, 1
          %s336 = scalar_lea.sflag [#allocation3], %s335
          %s337 = sand.u32 %s33, 1
          %s338 = smul.addr %s337, 16
          %s339 = scalar_lea.vmem [#allocation2], %s338
          %s341 = ssub.s32 256, 256
          %342 = vsyncadd %s336, %s341
          %s343 = smul.addr %s23, 2
          %s344 = smul.addr %s343, 128
          %s345 = scalar_lea.hbm %s0, %s344
          %s347 = sshll.u32 %s339, 4
          %s348 = int_to_ptr.vmem [resolvable:$true] %s347
          %350 = dma.hbm_to_vmem [thread:$0]  %s345, 256, %s348, %s336
        $region52: #{tpu_custom_call.1} parent=47 // pred_fallthru
          _
        // Predicated region
        $region53: #{tpu_custom_call.1} parent=47 // pred_check
          %p351 = pneg %p69
        $region54: #{tpu_custom_call.1} parent=47 // pred_check_branch
          %353 = sbr.rel (%p351) target = $region56
        $region55: #{tpu_custom_call.1} parent=47 // pred_region
          %p354 = scmp.lt.s32.totalorder %s23, 1
          %s355 = scalar_select %p354, %s23, 1
          %s356 = smul.addr %s355, 8
          %s357 = scalar_lea.vmem %s1, %s356
        $region56: #{tpu_custom_call.1} parent=47 // pred_fallthru
          _
      $region48: #{tpu_custom_call.1} parent=5 // pred_fallthru
        _
      %p358 = scmp.le.s32.totalorder 1, %s23
      %p359 = scmp.lt.s32.totalorder %s23, 3
      %p360 = pnand %p358, %p359
      %p361 = pneg %p360
      // Predicated region
      $region57: #{tpu_custom_call.1} parent=5 // pred_check
        _
      $region58: #{tpu_custom_call.1} parent=5 // pred_check_branch
        %363 = sbr.rel (%p360) target = $region60
      $region59: #{tpu_custom_call.1} parent=5 // pred_region
        %s364 = ssub.s32 %s23, 1
        %s365 = sand.u32 %s36, 1
        %s366 = scalar_lea.sflag [#allocation3], %s365
        %s367 = sand.u32 %s36, 1
        %s368 = smul.addr %s367, 16
        %s369 = scalar_lea.vmem [#allocation2], %s368
        // Predicated region
        $region61: #{tpu_custom_call.1} parent=59 // pred_check
          %p370 = pneg %p49
        $region62: #{tpu_custom_call.1} parent=59 // pred_check_branch
          %372 = sbr.rel (%p370) target = $region64
        $region63: #{tpu_custom_call.1} parent=59 // pred_region
          %373 = dma.done %s366, 256
        $region64: #{tpu_custom_call.1} parent=59 // pred_fallthru
          _
        // Predicated region
        $region65: #{tpu_custom_call.1} parent=59 // pred_check
          %p374 = pneg %p180
        $region66: #{tpu_custom_call.1} parent=59 // pred_check_branch
          %376 = sbr.rel (%p374) target = $region68
        $region67: #{tpu_custom_call.1} parent=59 // pred_region
          %377 = dma.done [#allocation6], 1024
        $region68: #{tpu_custom_call.1} parent=59 // pred_fallthru
          _
        // Predicated region
        $region69: #{tpu_custom_call.1} parent=59 // pred_check
          %p378 = pneg %p222
        $region70: #{tpu_custom_call.1} parent=59 // pred_check_branch
          %380 = sbr.rel (%p378) target = $region72
        $region71: #{tpu_custom_call.1} parent=59 // pred_region
          %381 = dma.done [#allocation6], 1024
        $region72: #{tpu_custom_call.1} parent=59 // pred_fallthru
          _
        %s382 = sand.u32 %s36, 1
        %s383 = scalar_lea.sflag [#allocation3], %s382
        %s384 = sand.u32 %s36, 1
        %s385 = smul.addr %s384, 16
        %s386 = scalar_lea.vmem [#allocation2], %s385
        %p387 = pneg %p49
        %p388 = pneg %p46
        %p389 = scmp.lt.s32.totalorder %s28, 1
        %s390 = scalar_select %p389, %s28, 1
        %s391 = smul.addr %s390, 8
        %s392 = scalar_lea.vmem %s1, %s391
        %p393 = pneg %p75
        %p394 = pneg %p72
        %p395 = pneg %p96
        %p396 = pneg %p93
        %p397 = pneg %p117
        %p398 = pneg %p114
        %p399 = pneg %p138
        %p400 = pneg %p135
        %p401 = pneg %p159
        %p402 = pneg %p156
        %p403 = pneg %p180
        %p404 = pneg %p177
        %p405 = pneg %p201
        %p406 = pneg %p198
        %p407 = pneg %p222
        %p408 = pneg %p219
        %p409 = pneg %p243
        %p410 = pneg %p240
        %p411 = pneg %p269
        %p412 = pneg %p266
        %s413 = sand.u32 %s256, 1
        %s414 = scalar_lea.sflag [#allocation4], %s413
        %s415 = sand.u32 %s256, 1
        %s416 = smul.addr %s415, 8
        %s417 = scalar_lea.vmem [#allocation8], %s416
        %p418 = scmp.lt.s32.totalorder %s28, 1
        %s419 = scalar_select %p418, %s28, 1
        %s420 = smul.addr %s419, 8
        %s421 = scalar_lea.vmem %s1, %s420
        %v423 = vld [vmem:[%s369] sm:$0xff]
        %v424 = vld [vmem:[%s421] sm:$0xff]
        %426 = vset.pattern.permute.xlu0 0
        %427 = vperm.xlu0 %426, %v424
        %v428 = vpop.permute.xlu0 %427
        %v430 = vmul.f32 %v423, %v428
        %v431 = vld [vmem:[%s2] sm:$0x1]
        %v432 = vlaneseq
        %v433 = vshrl.u32 %v432, 7
        %v434 = vsub.s32 0, %v433
        %v435 = vrot.slane %v431, %v434
        %v436 = vmul.f32 %v430, %v435
        %v437 = vld [vmem:[%s369 + $0x8] sm:$0xff]
        %438 = vset.pattern.permute.xlu0 1
        %439 = vperm.xlu0 %438, %v424
        %v440 = vpop.permute.xlu0 %439
        %v442 = vmul.f32 %v437, %v440
        %v443 = vld [vmem:[%s2 + $0x1] sm:$0x1]
        %v444 = vlaneseq
        %v445 = vshrl.u32 %v444, 7
        %v446 = vsub.s32 0, %v445
        %v447 = vrot.slane %v443, %v446
        %v448 = vmul.f32 %v442, %v447
        %v449 = vadd.f32 %v436, %v448
        %v450 = vld [vmem:[%s3] sm:$0x1]
        %v452 = vlaneseq
        %v453 = vshrl.u32 %v452, 7
        %v454 = vsub.s32 0, %v453
        %v455 = vrot.slane %v450, %v454
        %v457 = vadd.f32 %v449, %v455
        %458 = vadd.xlane.f32.xlu0 %v457
        %v459 = vpop.xlane.xlu0 %458
        %v460 = vmul.f32 %v457, %v457
        %461 = vadd.xlane.f32.xlu0 %v460
        %v462 = vpop.xlane.xlu0 %461
        %v463 = vmul.f32 %v459, 0.03125
        %v464 = vmul.f32 %v462, 0.03125
        %v465 = vmul.f32 %v463, %v463
        %v466 = vsub.f32 %v464, %v465
        %v467 = vsub.f32 %v457, %v463
        %v468 = vadd.f32 %v466, 1e-05
        %v469 = vrsqrt.pop %v468
        %v470 = vmul.f32 %v467, %v469
        %v471 = vld [vmem:[%s4] sm:$0x1]
        %v473 = vlaneseq
        %v474 = vshrl.u32 %v473, 7
        %v475 = vsub.s32 0, %v474
        %v476 = vrot.slane %v471, %v475
        %v478 = vmul.f32 %v470, %v476
        %v479 = vld [vmem:[%s5] sm:$0x1]
        %v481 = vlaneseq
        %v482 = vshrl.u32 %v481, 7
        %v483 = vsub.s32 0, %v482
        %v484 = vrot.slane %v479, %v483
        %v486 = vadd.f32 %v478, %v484
        %v487 = vpack.c.bf16 %v486, %v486
        %v488 = vld [vmem:[#allocation5] sm:$0xf]
        %v489 = vld [vmem:[#allocation5 + $0x4] sm:$0xf]
        %v490 = vld [vmem:[#allocation5 + $0x8] sm:$0xf]
        %v491 = vld [vmem:[#allocation5 + $0xc] sm:$0xf]
        %v492 = vld [vmem:[#allocation5 + $0x10] sm:$0xf]
        %v493 = vld [vmem:[#allocation5 + $0x14] sm:$0xf]
        %v494 = vld [vmem:[#allocation5 + $0x18] sm:$0xf]
        %v495 = vld [vmem:[#allocation5 + $0x1c] sm:$0xf]
        %v496 = vld [vmem:[#allocation5 + $0x20] sm:$0xf]
        %v497 = vld [vmem:[#allocation5 + $0x24] sm:$0xf]
        %v498 = vld [vmem:[#allocation5 + $0x28] sm:$0xf]
        %v499 = vld [vmem:[#allocation5 + $0x2c] sm:$0xf]
        %v500 = vld [vmem:[#allocation5 + $0x30] sm:$0xf]
        %v501 = vld [vmem:[#allocation5 + $0x34] sm:$0xf]
        %v502 = vld [vmem:[#allocation5 + $0x38] sm:$0xf]
        %v503 = vld [vmem:[#allocation5 + $0x3c] sm:$0xf]
        %v504 = vld [vmem:[%s7] sm:$0x1]
        %v506 = vlaneseq
        %v507 = vshrl.u32 %v506, 7
        %v508 = vsub.s32 0, %v507
        %v509 = vrot.slane %v504, %v508
        %v527 = vunpack.c.l.b16 %v488
        %v528 = vunpack.c.l.b16 %v489
        %v529 = vunpack.c.l.b16 %v490
        %v530 = vunpack.c.l.b16 %v491
        %v531 = vunpack.c.l.b16 %v492
        %v532 = vunpack.c.l.b16 %v493
        %v533 = vunpack.c.l.b16 %v494
        %v534 = vunpack.c.l.b16 %v495
        %v535 = vunpack.c.l.b16 %v496
        %v536 = vunpack.c.l.b16 %v497
        %v537 = vunpack.c.l.b16 %v498
        %v538 = vunpack.c.l.b16 %v499
        %v539 = vunpack.c.l.b16 %v500
        %v540 = vunpack.c.l.b16 %v501
        %v541 = vunpack.c.l.b16 %v502
        %v542 = vunpack.c.l.b16 %v503
        %v543 = vpack.c.b16 %v528, %v527
        %v544 = vpack.c.b16 %v530, %v529
        %v545 = vpack.c.b16 %v532, %v531
        %v546 = vpack.c.b16 %v534, %v533
        %v547 = vpack.c.b16 %v536, %v535
        %v548 = vpack.c.b16 %v538, %v537
        %v549 = vpack.c.b16 %v540, %v539
        %v550 = vpack.c.b16 %v542, %v541
        %559 = vmatprep.subr.bf16.mxu0 0
        %560 = vmatpush1.bf16.msra.mxu0 %v550
        %561 = vmatprep.subr.bf16.mxu0 0
        %562 = vmatpush1.bf16.msra.mxu0 %v549
        %563 = vmatprep.subr.bf16.mxu0 0
        %564 = vmatpush1.bf16.msra.mxu0 %v548
        %565 = vmatprep.subr.bf16.mxu0 0
        %566 = vmatpush1.bf16.msra.mxu0 %v547
        %567 = vmatprep.subr.bf16.mxu0 0
        %568 = vmatpush1.bf16.msra.mxu0 %v546
        %569 = vmatprep.subr.bf16.mxu0 0
        %570 = vmatpush1.bf16.msra.mxu0 %v545
        %571 = vmatprep.subr.bf16.mxu0 0
        %572 = vmatpush1.bf16.msra.mxu0 %v544
        %573 = vmatprep.subr.bf16.mxu0 0
        %574 = vmatpush1.bf16.msra.mxu0 %v543
        %575 = vmatprep.subr.bf16.mxu0 0
        %576 = vmatpush2.bf16.msra.mxu0 0
        %577 = vmatprep.subr.bf16.mxu0 0
        %578 = vmatpush2.bf16.msra.mxu0 0
        %579 = vmatprep.subr.bf16.mxu0 0
        %580 = vmatpush2.bf16.msra.mxu0 0
        %581 = vmatprep.subr.bf16.mxu0 0
        %582 = vmatpush2.bf16.msra.mxu0 0
        %583 = vmatprep.subr.bf16.mxu0 0
        %584 = vmatpush2.bf16.msra.mxu0 0
        %585 = vmatprep.subr.bf16.mxu0 0
        %586 = vmatpush2.bf16.msra.mxu0 0
        %587 = vmatprep.subr.bf16.mxu0 0
        %588 = vmatpush2.bf16.msra.mxu0 0
        %589 = vmatprep.subr.bf16.mxu0 0
        %590 = vmatpush2.bf16.msra.mxu0 0
        %591 = vmatprep.mubr.bf16.mxu0 0
        %592 = vmatmul.mubr.bf16.gmra.mxu0 %v487
        %v593 = vpop.f32.mrf.mxu0
        %v594 = vadd.f32 %v509, %v593
        %v595 = vpop.f32.mrf.mxu0
        %v596 = vpop.f32.mrf.mxu0
        %v597 = vpop.f32.mrf.mxu0
        %598 = vdwg.mxu0
        %v599 = vmul.f32 %v594, %v594
        %v600 = vmul.f32 %v594, %v599
        %v601 = vmul.f32 %v600, 0.044715
        %v602 = vadd.f32 %v594, %v601
        %v603 = vmul.f32 %v602, 0.7978846
        %v604 = vtanh.pop %v603
        %v605 = vadd.f32 %v604, 1.0
        %v606 = vmul.f32 %v605, 0.5
        %v607 = vmul.f32 %v594, %v606
        %v608 = vpack.c.bf16 %v607, %v607
        %v609 = vld [vmem:[#allocation7] sm:$0xf]
        %v610 = vld [vmem:[#allocation7 + $0x4] sm:$0xf]
        %v611 = vld [vmem:[#allocation7 + $0x8] sm:$0xf]
        %v612 = vld [vmem:[#allocation7 + $0xc] sm:$0xf]
        %v613 = vld [vmem:[#allocation7 + $0x10] sm:$0xf]
        %v614 = vld [vmem:[#allocation7 + $0x14] sm:$0xf]
        %v615 = vld [vmem:[#allocation7 + $0x18] sm:$0xf]
        %v616 = vld [vmem:[#allocation7 + $0x1c] sm:$0xf]
        %v617 = vld [vmem:[#allocation7 + $0x20] sm:$0xf]
        %v618 = vld [vmem:[#allocation7 + $0x24] sm:$0xf]
        %v619 = vld [vmem:[#allocation7 + $0x28] sm:$0xf]
        %v620 = vld [vmem:[#allocation7 + $0x2c] sm:$0xf]
        %v621 = vld [vmem:[#allocation7 + $0x30] sm:$0xf]
        %v622 = vld [vmem:[#allocation7 + $0x34] sm:$0xf]
        %v623 = vld [vmem:[#allocation7 + $0x38] sm:$0xf]
        %v624 = vld [vmem:[#allocation7 + $0x3c] sm:$0xf]
        %v625 = vld [vmem:[%s9] sm:$0x1]
        %v627 = vlaneseq
        %v628 = vshrl.u32 %v627, 7
        %v629 = vsub.s32 0, %v628
        %v630 = vrot.slane %v625, %v629
        %v648 = vunpack.c.l.b16 %v609
        %v649 = vunpack.c.l.b16 %v610
        %v650 = vunpack.c.l.b16 %v611
        %v651 = vunpack.c.l.b16 %v612
        %v652 = vunpack.c.l.b16 %v613
        %v653 = vunpack.c.l.b16 %v614
        %v654 = vunpack.c.l.b16 %v615
        %v655 = vunpack.c.l.b16 %v616
        %v656 = vunpack.c.l.b16 %v617
        %v657 = vunpack.c.l.b16 %v618
        %v658 = vunpack.c.l.b16 %v619
        %v659 = vunpack.c.l.b16 %v620
        %v660 = vunpack.c.l.b16 %v621
        %v661 = vunpack.c.l.b16 %v622
        %v662 = vunpack.c.l.b16 %v623
        %v663 = vunpack.c.l.b16 %v624
        %v664 = vpack.c.b16 %v649, %v648
        %v665 = vpack.c.b16 %v651, %v650
        %v666 = vpack.c.b16 %v653, %v652
        %v667 = vpack.c.b16 %v655, %v654
        %v668 = vpack.c.b16 %v657, %v656
        %v669 = vpack.c.b16 %v659, %v658
        %v670 = vpack.c.b16 %v661, %v660
        %v671 = vpack.c.b16 %v663, %v662
        %680 = vmatprep.subr.bf16.mxu0 0
        %681 = vmatpush1.bf16.msra.mxu0 %v671
        %682 = vmatprep.subr.bf16.mxu0 0
        %683 = vmatpush1.bf16.msra.mxu0 %v670
        %684 = vmatprep.subr.bf16.mxu0 0
        %685 = vmatpush1.bf16.msra.mxu0 %v669
        %686 = vmatprep.subr.bf16.mxu0 0
        %687 = vmatpush1.bf16.msra.mxu0 %v668
        %688 = vmatprep.subr.bf16.mxu0 0
        %689 = vmatpush1.bf16.msra.mxu0 %v667
        %690 = vmatprep.subr.bf16.mxu0 0
        %691 = vmatpush1.bf16.msra.mxu0 %v666
        %692 = vmatprep.subr.bf16.mxu0 0
        %693 = vmatpush1.bf16.msra.mxu0 %v665
        %694 = vmatprep.subr.bf16.mxu0 0
        %695 = vmatpush1.bf16.msra.mxu0 %v664
        %696 = vmatprep.subr.bf16.mxu0 0
        %697 = vmatpush2.bf16.msra.mxu0 0
        %698 = vmatprep.subr.bf16.mxu0 0
        %699 = vmatpush2.bf16.msra.mxu0 0
        %700 = vmatprep.subr.bf16.mxu0 0
        %701 = vmatpush2.bf16.msra.mxu0 0
        %702 = vmatprep.subr.bf16.mxu0 0
        %703 = vmatpush2.bf16.msra.mxu0 0
        %704 = vmatprep.subr.bf16.mxu0 0
        %705 = vmatpush2.bf16.msra.mxu0 0
        %706 = vmatprep.subr.bf16.mxu0 0
        %707 = vmatpush2.bf16.msra.mxu0 0
        %708 = vmatprep.subr.bf16.mxu0 0
        %709 = vmatpush2.bf16.msra.mxu0 0
        %710 = vmatprep.subr.bf16.mxu0 0
        %711 = vmatpush2.bf16.msra.mxu0 0
        %712 = vmatprep.mubr.bf16.mxu0 0
        %713 = vmatmul.mubr.bf16.gmra.mxu0 %v608
        %v714 = vpop.f32.mrf.mxu0
        %v715 = vadd.f32 %v630, %v714
        %v716 = vpop.f32.mrf.mxu0
        %v717 = vpop.f32.mrf.mxu0
        %v718 = vpop.f32.mrf.mxu0
        %719 = vdwg.mxu0
        %720 = vst [vmem:[%s417] sm:$0xff] %v715
        %s721 = sand.u32 %s256, 1
        %s722 = scalar_lea.sflag [#allocation4], %s721
        %s723 = sand.u32 %s256, 1
        %s724 = smul.addr %s723, 8
        %s725 = scalar_lea.vmem [#allocation8], %s724
        // Predicated region
        $region73: #{tpu_custom_call.1} parent=59 // pred_check
          %p726 = pneg %p266
        $region74: #{tpu_custom_call.1} parent=59 // pred_check_branch
          %728 = sbr.rel (%p726) target = $region76
        $region75: #{tpu_custom_call.1} parent=59 // pred_region
          %s730 = ssub.s32 128, 128
          %731 = vsyncadd %s722, %s730
          %s732 = smul.addr %s28, 128
          %s733 = scalar_lea.hbm %s10, %s732
          %s735 = sshll.u32 %s725, 4
          %s736 = int_to_ptr.vmem [resolvable:$true] %s735
          %738 = dma.vmem_to_hbm [thread:$0]  %s736, 128, %s733, %s722
        $region76: #{tpu_custom_call.1} parent=59 // pred_fallthru
          _
      $region60: #{tpu_custom_call.1} parent=5 // pred_fallthru
        _
      %p739 = scmp.le.s32.totalorder 2, %s23
      // Predicated region
      $region77: #{tpu_custom_call.1} parent=5 // pred_check
        %p740 = pneg %p739
      $region78: #{tpu_custom_call.1} parent=5 // pred_check_branch
        %742 = sbr.rel (%p740) target = $region80
      $region79: #{tpu_custom_call.1} parent=5 // pred_region
        %s743 = ssub.s32 %s23, 2
        // Predicated region
        $region81: #{tpu_custom_call.1} parent=79 // pred_check
          %p744 = pneg %p272
        $region82: #{tpu_custom_call.1} parent=79 // pred_check_branch
          %746 = sbr.rel (%p744) target = $region84
        $region83: #{tpu_custom_call.1} parent=79 // pred_region
          %s747 = sand.u32 %s257, 1
          %s748 = scalar_lea.sflag [#allocation4], %s747
          %s749 = sand.u32 %s257, 1
          %s750 = smul.addr %s749, 8
          %s751 = scalar_lea.vmem [#allocation8], %s750
          %752 = dma.done %s748, 128
        $region84: #{tpu_custom_call.1} parent=79 // pred_fallthru
          _
      $region80: #{tpu_custom_call.1} parent=5 // pred_fallthru
        _
    $region6: #{tpu_custom_call.1} parent=1 // loop_footer
      %s27 = sadd.s32 1, %s23
    $region7: #{tpu_custom_call.1} parent=1 // loop_footer_branch
      %22 = sbr.rel target = $region3
    $region8: #{tpu_custom_call.1} parent=1 // loop_exit
      _
    %753 = vsyncpa [#allocation3], 1
    %s754 = scalar_lea.sflag [#allocation3], 1
    %755 = vsyncpa %s754, 1
    %756 = vsyncpa [#allocation6], 1
    %757 = vsyncpa [#allocation4], 1
    %s758 = scalar_lea.sflag [#allocation4], 1
    %759 = vsyncpa %s758, 1

</llo_original>
